<compile_context>
chip_gen: v6e
topology: v6e:2x2x1
jax: 0.10.0
libtpu: 0.0.40
codegen_flags: <defaults>
</compile_context>

<pallas_src>
import jax
import jax.numpy as jnp
from jax.experimental import pallas as pl
from jax.experimental.pallas import tpu as pltpu

LANE = 128
SUBLANE = 16   # bf16 sublane packing; batch tiles kept a multiple of this


def lstm_pooling_kernel(x_ref, wih_ref, whh_ref, b_ref, out_ref, gx_ref):
    # x_ref  : [L, TB, Hin]  bf16  time-major batch tile of pooled CLS features
    # wih_ref: [Hin, 4*Hp]   bf16  input->gates (gate slabs padded to Hp lanes, order i,f,g,o)
    # whh_ref: [Hp, 4*Hp]    bf16  hidden->gates (padded rows & columns)
    # b_ref  : [1, 4*Hp]     f32   b_ih + b_hh (padded)
    # out_ref: [TB, Hp]      f32   lane-dense final hidden state (sliced in wrapper)
    # gx_ref : [L*TB, 4*Hp]  f32   scratch: whole input projection for this tile
    L, TB, Hin = x_ref.shape
    Hp = out_ref.shape[1]

    wih = wih_ref[...]
    whh = whh_ref[...]

    # ---- input projection: ONE MXU matmul for all L timesteps, bias added once. ----
    # (L, TB, Hin) -> (L*TB, Hin) only merges leading dims (TB is a multiple of the bf16
    # sublane tile, so the merge is layout-aligned). Storing the result in one VMEM
    # scratch buffer (instead of T live f32 values) keeps vreg/VMEM pressure off the
    # serial recurrence.  (Optionally this scratch could be bf16 to halve its footprint.)
    x2d = x_ref[...].reshape(L * TB, Hin)
    gx_ref[...] = jnp.dot(x2d, wih, preferred_element_type=jnp.float32) + b_ref[...]

    def sigmoid(z):
        # tanh identity: a single EUP push instead of exp+add+divide on the serial path.
        return 0.5 * jnp.tanh(0.5 * z) + 0.5

    h = jnp.zeros((TB, Hp), jnp.float32)
    c = jnp.zeros((TB, Hp), jnp.float32)

    # L = num_layers is a small static trip count -> unrolled Python loop. Only the
    # [TB,Hp]x[Hp,4*Hp] hidden->gates matmul stays on the serial critical path; the gx
    # slab read is a contiguous row range with no h-dependency, so it overlaps freely.
    for t in range(L):
        gates = gx_ref[t * TB:(t + 1) * TB, :] + jnp.dot(
            h.astype(whh.dtype), whh, preferred_element_type=jnp.float32)  # [TB, 4*Hp] f32
        # Gate slabs are whole 128-lane blocks (Hp is a multiple of 128): no lane shuffles.
        i_g = sigmoid(gates[:, 0 * Hp:1 * Hp])
        f_g = sigmoid(gates[:, 1 * Hp:2 * Hp])
        g_g = jnp.tanh(gates[:, 2 * Hp:3 * Hp])
        o_g = sigmoid(gates[:, 3 * Hp:4 * Hp])
        c = f_g * c + i_g * g_g
        h = o_g * jnp.tanh(c)
        # Padded lanes [Hl:Hp]: W/bias padding is exactly 0 -> i=f=o=0.5, g=0, so the
        # padded c/h lanes stay 0 throughout the recurrence.

    # out[:, -1, :] of the LSTM sequence output == final hidden state h_T.
    out_ref[...] = h.astype(out_ref.dtype)


def _pad_gate_cols(w, hl, hp):
    """Torch-layout weight [4*hl, K] -> transposed [K, 4*hp], each gate slab padded to hp."""
    k = w.shape[1]
    w4 = w.reshape(4, hl, k)                                   # (gate, hl, K)
    wp = jnp.zeros((4, hp, k), w.dtype).at[:, :hl, :].set(w4)  # (gate, hp, K)
    return wp.reshape(4 * hp, k).T                             # [K, 4*hp]


def _auto_batch_tile():
    # v5e / v6e: 128 MiB VMEM -> TB=256 halves the number of serial grid iterations.
    # v7x: 64 MiB VMEM -> stay at 128 so x(2 bufs) + gx + weights fit with headroom.
    try:
        vmem = getattr(pltpu.get_tpu_info(), "vmem_capacity_bytes", 0)
        if vmem >= (100 << 20):
            return 256
    except Exception:
        pass
    return 128


def lstm_pooling_forward(all_hidden_states, params, num_layers, hidden_size,
                         hiddendim_lstm, *, batch_tile=None):
    L, H, Hl = num_layers, hidden_size, hiddendim_lstm
    Hp = ((Hl + LANE - 1) // LANE) * LANE     # lane-dense padded LSTM hidden size

    # ---- glue (plain JAX): torch.stack([...][:, 0], dim=-1).view(-1, L, H) ----
    # bf16 cast first so the relayout moves half the bytes. The .view is a free row-major
    # reshape (bug-compatible, NOT a transpose); the single transpose below composes it
    # with the time-major [L, B, H] layout the kernel wants (contiguous per-t slabs).
    cls = [all_hidden_states[l][:, 0].astype(jnp.bfloat16) for l in range(1, L + 1)]
    stacked = jnp.stack(cls, axis=-1)          # [B, H, L]
    x = stacked.reshape(-1, L, H)              # raw .view semantics (bug-compatible)
    B = x.shape[0]
    x_tm = jnp.transpose(x, (1, 0, 2))         # [L, B, H] time-major (one bf16 relayout)

    # ---- weights: transpose + pad each gate slab to full 128-lane blocks (order i,f,g,o) ----
    wih_t = _pad_gate_cols(params["weight_ih"], Hl, Hp).astype(jnp.bfloat16)     # [H,  4*Hp]
    whh_c = _pad_gate_cols(params["weight_hh"], Hl, Hp)                          # [Hl, 4*Hp]
    whh_t = jnp.zeros((Hp, 4 * Hp), whh_c.dtype).at[:Hl, :].set(whh_c)
    whh_t = whh_t.astype(jnp.bfloat16)                                           # [Hp, 4*Hp]
    bias = (params["bias_ih"] + params["bias_hh"]).astype(jnp.float32).reshape(4, Hl)
    bias_p = jnp.zeros((4, Hp), jnp.float32).at[:, :Hl].set(bias).reshape(1, 4 * Hp)

    # ---- batch tiling: TB is a multiple of 16 so the bf16 leading-dim merge stays aligned ----
    if batch_tile is None:
        batch_tile = _auto_batch_tile()
    b16 = ((B + SUBLANE - 1) // SUBLANE) * SUBLANE
    TB = min(max(SUBLANE, (batch_tile // SUBLANE) * SUBLANE), b16)
    B_pad = ((B + TB - 1) // TB) * TB
    if B_pad != B:
        x_tm = jnp.pad(x_tm, ((0, 0), (0, B_pad - B), (0, 0)))
    grid = (B_pad // TB,)

    # ---- explicit VMEM budget (x double-buffered, weights single-buffered, gx scratch) ----
    vmem_est = (
        2 * L * TB * H * 2                      # x tile, double-buffered bf16
        + (H + Hp) * 4 * Hp * 2 + 4 * Hp * 4    # W_ih + W_hh + bias, single-buffered
        + 2 * TB * Hp * 4                       # out tile, double-buffered f32
        + L * TB * 4 * Hp * 4                   # gx scratch (f32)
        + 6 * TB * 4 * Hp * 4                   # live gate / recurrence temporaries
    )
    vmem_limit = min(100 << 20, max(32 << 20, int(1.5 * vmem_est)))

    out = pl.pallas_call(
        lstm_pooling_kernel,
        out_shape=jax.ShapeDtypeStruct((B_pad, Hp), jnp.float32),
        grid=grid,
        in_specs=[
            # batch-tiled time-major input: double-buffered DMA across the batch grid
            pl.BlockSpec((L, TB, H), lambda i: (0, i, 0)),
            # constant-index weights/bias: single-buffered (no pointless second copy)
            pl.BlockSpec(wih_t.shape, lambda i: (0, 0), pipeline_mode=pl.Buffered(1)),
            pl.BlockSpec(whh_t.shape, lambda i: (0, 0), pipeline_mode=pl.Buffered(1)),
            pl.BlockSpec(bias_p.shape, lambda i: (0, 0), pipeline_mode=pl.Buffered(1)),
        ],
        out_specs=pl.BlockSpec((TB, Hp), lambda i: (i, 0)),     # lane-dense (Hp = k*128)
        scratch_shapes=[pltpu.VMEM((L * TB, 4 * Hp), jnp.float32)],
        compiler_params=pltpu.CompilerParams(
            # batch axis is embarrassingly parallel -> shards across v7x's 2 TensorCores;
            # harmless no-op on v5e/v6e.
            dimension_semantics=("parallel",),
            vmem_limit_bytes=vmem_limit,
        ),
    )(x_tm, wih_t, whh_t, bias_p)

    # nn.Dropout(0.1): identity at inference. Slice off batch/lane padding.
    return out[:B, :Hl]


def reference_forward(all_hidden_states, params, num_layers, hidden_size,
                      hiddendim_lstm):
    """Pure-JAX f32 reference matching torch.nn.LSTM math, for a correctness check."""
    cls_tokens = [all_hidden_states[l][:, 0] for l in range(1, num_layers + 1)]
    stacked = jnp.stack(cls_tokens, axis=-1)
    x = stacked.reshape(-1, num_layers, hidden_size).astype(jnp.float32)

    Hl = hiddendim_lstm
    wih, whh = params["weight_ih"], params["weight_hh"]
    b = params["bias_ih"] + params["bias_hh"]
    B = x.shape[0]
    h = jnp.zeros((B, Hl), jnp.float32)
    c = jnp.zeros((B, Hl), jnp.float32)
    for t in range(num_layers):
        gates = x[:, t, :] @ wih.T + h @ whh.T + b
        i_g = jax.nn.sigmoid(gates[:, 0 * Hl:1 * Hl])
        f_g = jax.nn.sigmoid(gates[:, 1 * Hl:2 * Hl])
        g_g = jnp.tanh(gates[:, 2 * Hl:3 * Hl])
        o_g = jax.nn.sigmoid(gates[:, 3 * Hl:4 * Hl])
        c = f_g * c + i_g * g_g
        h = o_g * jnp.tanh(c)
    return h


if __name__ == "__main__":
    # Small, deterministic config (multi-tile grid: batch=32, batch_tile=16 -> grid=(2,)).
    num_layers = 6        # LSTM "sequence length" = number of transformer layers pooled
    hidden_size = 64      # transformer hidden size (LSTM input size)
    hiddendim_lstm = 32   # LSTM hidden size (output dim)
    batch = 32
    seq_len = 8           # transformer sequence length (only token 0 is used)

    key = jax.random.PRNGKey(0)
    k_states, k_wih, k_whh, k_bih, k_bhh = jax.random.split(key, 5)

    # all_hidden_states: tuple of (num_layers + 1) arrays, each [B, S, hidden_size]
    state_keys = jax.random.split(k_states, num_layers + 1)
    all_hidden_states = tuple(
        jax.random.normal(state_keys[i], (batch, seq_len, hidden_size), jnp.float32)
        for i in range(num_layers + 1)
    )

    # Deterministic LSTM parameters (PyTorch-style uniform(-1/sqrt(Hl), 1/sqrt(Hl))).
    bound = 1.0 / (hiddendim_lstm ** 0.5)
    params = {
        "weight_ih": jax.random.uniform(k_wih, (4 * hiddendim_lstm, hidden_size),
                                        jnp.float32, -bound, bound),
        "weight_hh": jax.random.uniform(k_whh, (4 * hiddendim_lstm, hiddendim_lstm),
                                        jnp.float32, -bound, bound),
        "bias_ih": jax.random.uniform(k_bih, (4 * hiddendim_lstm,),
                                      jnp.float32, -bound, bound),
        "bias_hh": jax.random.uniform(k_bhh, (4 * hiddendim_lstm,),
                                      jnp.float32, -bound, bound),
    }

    out = lstm_pooling_forward(all_hidden_states, params, num_layers,
                               hidden_size, hiddendim_lstm, batch_tile=16)
    out = jax.block_until_ready(out)

    ref = reference_forward(all_hidden_states, params, num_layers,
                            hidden_size, hiddendim_lstm)
    assert out.shape == (batch, hiddendim_lstm)
    # bf16 MXU inputs (f32 accumulation/state) -> loosened tolerance vs the f32 reference.
    assert jnp.allclose(out, ref, atol=3e-2, rtol=3e-2), "mismatch vs reference"

    print("KERNEL_OK")
</pallas_src>

<mosaic_0001>
module attributes {stable_mosaic.version = 11 : i64} {
  func.func @lstm_pooling_kernel(%arg0: i32, %arg1: memref<6x16x64xbf16, #tpu.memory_space<vmem>>, %arg2: memref<64x512xbf16, #tpu.memory_space<vmem>>, %arg3: memref<128x512xbf16, #tpu.memory_space<vmem>>, %arg4: memref<1x512xf32, #tpu.memory_space<vmem>>, %arg5: memref<16x128xf32, #tpu.memory_space<vmem>>, %arg6: memref<96x512xf32, #tpu.memory_space<vmem>>) attributes {dimension_semantics = [#tpu.dimension_semantics<parallel>], iteration_bounds = array<i64: 2>, scalar_prefetch = 0 : i64, scratch_operands = 1 : i64, tpu.core_type = #tpu.core_type<tc>, window_params = [{transform_indices = @transform_0, window_bounds = array<i64: 6, 16, 64>}, {pipeline_mode = #tpu.pipeline_mode<synchronous>, transform_indices = @transform_1, window_bounds = array<i64: 64, 512>}, {pipeline_mode = #tpu.pipeline_mode<synchronous>, transform_indices = @transform_2, window_bounds = array<i64: 128, 512>}, {pipeline_mode = #tpu.pipeline_mode<synchronous>, transform_indices = @transform_3, window_bounds = array<i64: 1, 512>}, {transform_indices = @transform_4, window_bounds = array<i64: 16, 128>}]} {
    %c0 = arith.constant 0 : index
    %c0_0 = arith.constant 0 : index
    %0 = vector.load %arg2[%c0, %c0_0] : memref<64x512xbf16, #tpu.memory_space<vmem>>, vector<64x512xbf16>
    %c0_1 = arith.constant 0 : index
    %c0_2 = arith.constant 0 : index
    %1 = vector.load %arg3[%c0_1, %c0_2] : memref<128x512xbf16, #tpu.memory_space<vmem>>, vector<128x512xbf16>
    %c0_3 = arith.constant 0 : index
    %c0_4 = arith.constant 0 : index
    %c0_5 = arith.constant 0 : index
    %2 = vector.load %arg1[%c0_3, %c0_4, %c0_5] : memref<6x16x64xbf16, #tpu.memory_space<vmem>>, vector<6x16x64xbf16>
    %3 = vector.shape_cast %2 : vector<6x16x64xbf16> to vector<96x64xbf16>
    %cst = arith.constant dense<0.000000e+00> : vector<96x512xf32>
    %4 = tpu.matmul %3, %0, %cst {dimension_numbers = #tpu.dot_dimension_numbers<[1], [0], [0], [1], [0, 0, 1, 1], [], []>} : vector<96x64xbf16>, vector<64x512xbf16>, vector<96x512xf32> -> vector<96x512xf32>
    %c0_6 = arith.constant 0 : index
    %c0_7 = arith.constant 0 : index
    %5 = vector.load %arg4[%c0_6, %c0_7] : memref<1x512xf32, #tpu.memory_space<vmem>>, vector<1x512xf32>
    %6 = vector.broadcast %5 : vector<1x512xf32> to vector<96x512xf32>
    %7 = arith.addf %4, %6 : vector<96x512xf32>
    %c0_8 = arith.constant 0 : index
    %c0_9 = arith.constant 0 : index
    %8 = vector.load %arg6[%c0_8, %c0_9] : memref<96x512xf32, #tpu.memory_space<vmem>>, vector<96x512xf32>
    tpu.vector_store %arg6[%c0_8, %c0_9], %7 {strides = array<i32>} : memref<96x512xf32, #tpu.memory_space<vmem>>, vector<96x512xf32>,
    %cst_10 = arith.constant 0.000000e+00 : f32
    %9 = vector.broadcast %cst_10 : f32 to vector<16x128xf32>
    %cst_11 = arith.constant 0.000000e+00 : f32
    %10 = vector.broadcast %cst_11 : f32 to vector<16x128xf32>
    %c0_12 = arith.constant 0 : index
    %c0_13 = arith.constant 0 : index
    %11 = vector.load %arg6[%c0_12, %c0_13] : memref<96x512xf32, #tpu.memory_space<vmem>>, vector<16x512xf32>
    %12 = arith.truncf %9 : vector<16x128xf32> to vector<16x128xbf16>
    %cst_14 = arith.constant dense<0.000000e+00> : vector<16x512xf32>
    %13 = tpu.matmul %12, %1, %cst_14 {dimension_numbers = #tpu.dot_dimension_numbers<[1], [0], [0], [1], [0, 0, 1, 1], [], []>} : vector<16x128xbf16>, vector<128x512xbf16>, vector<16x512xf32> -> vector<16x512xf32>
    %14 = arith.addf %11, %13 : vector<16x512xf32>
    %15 = vector.extract_strided_slice %14 {offsets = [0, 0], sizes = [16, 128], strides = [1, 1]} : vector<16x512xf32> to vector<16x128xf32>
    %cst_15 = arith.constant 5.000000e-01 : f32
    %16 = vector.broadcast %cst_15 : f32 to vector<16x128xf32>
    %17 = arith.mulf %16, %15 : vector<16x128xf32>
    %18 = math.tanh %17 : vector<16x128xf32>
    %cst_16 = arith.constant 5.000000e-01 : f32
    %19 = vector.broadcast %cst_16 : f32 to vector<16x128xf32>
    %20 = arith.mulf %19, %18 : vector<16x128xf32>
    %cst_17 = arith.constant 5.000000e-01 : f32
    %21 = vector.broadcast %cst_17 : f32 to vector<16x128xf32>
    %22 = arith.addf %20, %21 : vector<16x128xf32>
    %23 = vector.extract_strided_slice %14 {offsets = [0, 128], sizes = [16, 128], strides = [1, 1]} : vector<16x512xf32> to vector<16x128xf32>
    %cst_18 = arith.constant 5.000000e-01 : f32
    %24 = vector.broadcast %cst_18 : f32 to vector<16x128xf32>
    %25 = arith.mulf %24, %23 : vector<16x128xf32>
    %26 = math.tanh %25 : vector<16x128xf32>
    %cst_19 = arith.constant 5.000000e-01 : f32
    %27 = vector.broadcast %cst_19 : f32 to vector<16x128xf32>
    %28 = arith.mulf %27, %26 : vector<16x128xf32>
    %cst_20 = arith.constant 5.000000e-01 : f32
    %29 = vector.broadcast %cst_20 : f32 to vector<16x128xf32>
    %30 = arith.addf %28, %29 : vector<16x128xf32>
    %31 = vector.extract_strided_slice %14 {offsets = [0, 256], sizes = [16, 128], strides = [1, 1]} : vector<16x512xf32> to vector<16x128xf32>
    %32 = math.tanh %31 : vector<16x128xf32>
    %33 = vector.extract_strided_slice %14 {offsets = [0, 384], sizes = [16, 128], strides = [1, 1]} : vector<16x512xf32> to vector<16x128xf32>
    %cst_21 = arith.constant 5.000000e-01 : f32
    %34 = vector.broadcast %cst_21 : f32 to vector<16x128xf32>
    %35 = arith.mulf %34, %33 : vector<16x128xf32>
    %36 = math.tanh %35 : vector<16x128xf32>
    %cst_22 = arith.constant 5.000000e-01 : f32
    %37 = vector.broadcast %cst_22 : f32 to vector<16x128xf32>
    %38 = arith.mulf %37, %36 : vector<16x128xf32>
    %cst_23 = arith.constant 5.000000e-01 : f32
    %39 = vector.broadcast %cst_23 : f32 to vector<16x128xf32>
    %40 = arith.addf %38, %39 : vector<16x128xf32>
    %41 = arith.mulf %30, %10 : vector<16x128xf32>
    %42 = arith.mulf %22, %32 : vector<16x128xf32>
    %43 = arith.addf %41, %42 : vector<16x128xf32>
    %44 = math.tanh %43 : vector<16x128xf32>
    %45 = arith.mulf %40, %44 : vector<16x128xf32>
    %c16 = arith.constant 16 : index
    %c0_24 = arith.constant 0 : index
    %46 = vector.load %arg6[%c16, %c0_24] : memref<96x512xf32, #tpu.memory_space<vmem>>, vector<16x512xf32>
    %47 = arith.truncf %45 : vector<16x128xf32> to vector<16x128xbf16>
    %cst_25 = arith.constant dense<0.000000e+00> : vector<16x512xf32>
    %48 = tpu.matmul %47, %1, %cst_25 {dimension_numbers = #tpu.dot_dimension_numbers<[1], [0], [0], [1], [0, 0, 1, 1], [], []>} : vector<16x128xbf16>, vector<128x512xbf16>, vector<16x512xf32> -> vector<16x512xf32>
    %49 = arith.addf %46, %48 : vector<16x512xf32>
    %50 = vector.extract_strided_slice %49 {offsets = [0, 0], sizes = [16, 128], strides = [1, 1]} : vector<16x512xf32> to vector<16x128xf32>
    %cst_26 = arith.constant 5.000000e-01 : f32
    %51 = vector.broadcast %cst_26 : f32 to vector<16x128xf32>
    %52 = arith.mulf %51, %50 : vector<16x128xf32>
    %53 = math.tanh %52 : vector<16x128xf32>
    %cst_27 = arith.constant 5.000000e-01 : f32
    %54 = vector.broadcast %cst_27 : f32 to vector<16x128xf32>
    %55 = arith.mulf %54, %53 : vector<16x128xf32>
    %cst_28 = arith.constant 5.000000e-01 : f32
    %56 = vector.broadcast %cst_28 : f32 to vector<16x128xf32>
    %57 = arith.addf %55, %56 : vector<16x128xf32>
    %58 = vector.extract_strided_slice %49 {offsets = [0, 128], sizes = [16, 128], strides = [1, 1]} : vector<16x512xf32> to vector<16x128xf32>
    %cst_29 = arith.constant 5.000000e-01 : f32
    %59 = vector.broadcast %cst_29 : f32 to vector<16x128xf32>
    %60 = arith.mulf %59, %58 : vector<16x128xf32>
    %61 = math.tanh %60 : vector<16x128xf32>
    %cst_30 = arith.constant 5.000000e-01 : f32
    %62 = vector.broadcast %cst_30 : f32 to vector<16x128xf32>
    %63 = arith.mulf %62, %61 : vector<16x128xf32>
    %cst_31 = arith.constant 5.000000e-01 : f32
    %64 = vector.broadcast %cst_31 : f32 to vector<16x128xf32>
    %65 = arith.addf %63, %64 : vector<16x128xf32>
    %66 = vector.extract_strided_slice %49 {offsets = [0, 256], sizes = [16, 128], strides = [1, 1]} : vector<16x512xf32> to vector<16x128xf32>
    %67 = math.tanh %66 : vector<16x128xf32>
    %68 = vector.extract_strided_slice %49 {offsets = [0, 384], sizes = [16, 128], strides = [1, 1]} : vector<16x512xf32> to vector<16x128xf32>
    %cst_32 = arith.constant 5.000000e-01 : f32
    %69 = vector.broadcast %cst_32 : f32 to vector<16x128xf32>
    %70 = arith.mulf %69, %68 : vector<16x128xf32>
    %71 = math.tanh %70 : vector<16x128xf32>
    %cst_33 = arith.constant 5.000000e-01 : f32
    %72 = vector.broadcast %cst_33 : f32 to vector<16x128xf32>
    %73 = arith.mulf %72, %71 : vector<16x128xf32>
    %cst_34 = arith.constant 5.000000e-01 : f32
    %74 = vector.broadcast %cst_34 : f32 to vector<16x128xf32>
    %75 = arith.addf %73, %74 : vector<16x128xf32>
    %76 = arith.mulf %65, %43 : vector<16x128xf32>
    %77 = arith.mulf %57, %67 : vector<16x128xf32>
    %78 = arith.addf %76, %77 : vector<16x128xf32>
    %79 = math.tanh %78 : vector<16x128xf32>
    %80 = arith.mulf %75, %79 : vector<16x128xf32>
    %c32 = arith.constant 32 : index
    %c0_35 = arith.constant 0 : index
    %81 = vector.load %arg6[%c32, %c0_35] : memref<96x512xf32, #tpu.memory_space<vmem>>, vector<16x512xf32>
    %82 = arith.truncf %80 : vector<16x128xf32> to vector<16x128xbf16>
    %cst_36 = arith.constant dense<0.000000e+00> : vector<16x512xf32>
    %83 = tpu.matmul %82, %1, %cst_36 {dimension_numbers = #tpu.dot_dimension_numbers<[1], [0], [0], [1], [0, 0, 1, 1], [], []>} : vector<16x128xbf16>, vector<128x512xbf16>, vector<16x512xf32> -> vector<16x512xf32>
    %84 = arith.addf %81, %83 : vector<16x512xf32>
    %85 = vector.extract_strided_slice %84 {offsets = [0, 0], sizes = [16, 128], strides = [1, 1]} : vector<16x512xf32> to vector<16x128xf32>
    %cst_37 = arith.constant 5.000000e-01 : f32
    %86 = vector.broadcast %cst_37 : f32 to vector<16x128xf32>
    %87 = arith.mulf %86, %85 : vector<16x128xf32>
    %88 = math.tanh %87 : vector<16x128xf32>
    %cst_38 = arith.constant 5.000000e-01 : f32
    %89 = vector.broadcast %cst_38 : f32 to vector<16x128xf32>
    %90 = arith.mulf %89, %88 : vector<16x128xf32>
    %cst_39 = arith.constant 5.000000e-01 : f32
    %91 = vector.broadcast %cst_39 : f32 to vector<16x128xf32>
    %92 = arith.addf %90, %91 : vector<16x128xf32>
    %93 = vector.extract_strided_slice %84 {offsets = [0, 128], sizes = [16, 128], strides = [1, 1]} : vector<16x512xf32> to vector<16x128xf32>
    %cst_40 = arith.constant 5.000000e-01 : f32
    %94 = vector.broadcast %cst_40 : f32 to vector<16x128xf32>
    %95 = arith.mulf %94, %93 : vector<16x128xf32>
    %96 = math.tanh %95 : vector<16x128xf32>
    %cst_41 = arith.constant 5.000000e-01 : f32
    %97 = vector.broadcast %cst_41 : f32 to vector<16x128xf32>
    %98 = arith.mulf %97, %96 : vector<16x128xf32>
    %cst_42 = arith.constant 5.000000e-01 : f32
    %99 = vector.broadcast %cst_42 : f32 to vector<16x128xf32>
    %100 = arith.addf %98, %99 : vector<16x128xf32>
    %101 = vector.extract_strided_slice %84 {offsets = [0, 256], sizes = [16, 128], strides = [1, 1]} : vector<16x512xf32> to vector<16x128xf32>
    %102 = math.tanh %101 : vector<16x128xf32>
    %103 = vector.extract_strided_slice %84 {offsets = [0, 384], sizes = [16, 128], strides = [1, 1]} : vector<16x512xf32> to vector<16x128xf32>
    %cst_43 = arith.constant 5.000000e-01 : f32
    %104 = vector.broadcast %cst_43 : f32 to vector<16x128xf32>
    %105 = arith.mulf %104, %103 : vector<16x128xf32>
    %106 = math.tanh %105 : vector<16x128xf32>
    %cst_44 = arith.constant 5.000000e-01 : f32
    %107 = vector.broadcast %cst_44 : f32 to vector<16x128xf32>
    %108 = arith.mulf %107, %106 : vector<16x128xf32>
    %cst_45 = arith.constant 5.000000e-01 : f32
    %109 = vector.broadcast %cst_45 : f32 to vector<16x128xf32>
    %110 = arith.addf %108, %109 : vector<16x128xf32>
    %111 = arith.mulf %100, %78 : vector<16x128xf32>
    %112 = arith.mulf %92, %102 : vector<16x128xf32>
    %113 = arith.addf %111, %112 : vector<16x128xf32>
    %114 = math.tanh %113 : vector<16x128xf32>
    %115 = arith.mulf %110, %114 : vector<16x128xf32>
    %c48 = arith.constant 48 : index
    %c0_46 = arith.constant 0 : index
    %116 = vector.load %arg6[%c48, %c0_46] : memref<96x512xf32, #tpu.memory_space<vmem>>, vector<16x512xf32>
    %117 = arith.truncf %115 : vector<16x128xf32> to vector<16x128xbf16>
    %cst_47 = arith.constant dense<0.000000e+00> : vector<16x512xf32>
    %118 = tpu.matmul %117, %1, %cst_47 {dimension_numbers = #tpu.dot_dimension_numbers<[1], [0], [0], [1], [0, 0, 1, 1], [], []>} : vector<16x128xbf16>, vector<128x512xbf16>, vector<16x512xf32> -> vector<16x512xf32>
    %119 = arith.addf %116, %118 : vector<16x512xf32>
    %120 = vector.extract_strided_slice %119 {offsets = [0, 0], sizes = [16, 128], strides = [1, 1]} : vector<16x512xf32> to vector<16x128xf32>
    %cst_48 = arith.constant 5.000000e-01 : f32
    %121 = vector.broadcast %cst_48 : f32 to vector<16x128xf32>
    %122 = arith.mulf %121, %120 : vector<16x128xf32>
    %123 = math.tanh %122 : vector<16x128xf32>
    %cst_49 = arith.constant 5.000000e-01 : f32
    %124 = vector.broadcast %cst_49 : f32 to vector<16x128xf32>
    %125 = arith.mulf %124, %123 : vector<16x128xf32>
    %cst_50 = arith.constant 5.000000e-01 : f32
    %126 = vector.broadcast %cst_50 : f32 to vector<16x128xf32>
    %127 = arith.addf %125, %126 : vector<16x128xf32>
    %128 = vector.extract_strided_slice %119 {offsets = [0, 128], sizes = [16, 128], strides = [1, 1]} : vector<16x512xf32> to vector<16x128xf32>
    %cst_51 = arith.constant 5.000000e-01 : f32
    %129 = vector.broadcast %cst_51 : f32 to vector<16x128xf32>
    %130 = arith.mulf %129, %128 : vector<16x128xf32>
    %131 = math.tanh %130 : vector<16x128xf32>
    %cst_52 = arith.constant 5.000000e-01 : f32
    %132 = vector.broadcast %cst_52 : f32 to vector<16x128xf32>
    %133 = arith.mulf %132, %131 : vector<16x128xf32>
    %cst_53 = arith.constant 5.000000e-01 : f32
    %134 = vector.broadcast %cst_53 : f32 to vector<16x128xf32>
    %135 = arith.addf %133, %134 : vector<16x128xf32>
    %136 = vector.extract_strided_slice %119 {offsets = [0, 256], sizes = [16, 128], strides = [1, 1]} : vector<16x512xf32> to vector<16x128xf32>
    %137 = math.tanh %136 : vector<16x128xf32>
    %138 = vector.extract_strided_slice %119 {offsets = [0, 384], sizes = [16, 128], strides = [1, 1]} : vector<16x512xf32> to vector<16x128xf32>
    %cst_54 = arith.constant 5.000000e-01 : f32
    %139 = vector.broadcast %cst_54 : f32 to vector<16x128xf32>
    %140 = arith.mulf %139, %138 : vector<16x128xf32>
    %141 = math.tanh %140 : vector<16x128xf32>
    %cst_55 = arith.constant 5.000000e-01 : f32
    %142 = vector.broadcast %cst_55 : f32 to vector<16x128xf32>
    %143 = arith.mulf %142, %141 : vector<16x128xf32>
    %cst_56 = arith.constant 5.000000e-01 : f32
    %144 = vector.broadcast %cst_56 : f32 to vector<16x128xf32>
    %145 = arith.addf %143, %144 : vector<16x128xf32>
    %146 = arith.mulf %135, %113 : vector<16x128xf32>
    %147 = arith.mulf %127, %137 : vector<16x128xf32>
    %148 = arith.addf %146, %147 : vector<16x128xf32>
    %149 = math.tanh %148 : vector<16x128xf32>
    %150 = arith.mulf %145, %149 : vector<16x128xf32>
    %c64 = arith.constant 64 : index
    %c0_57 = arith.constant 0 : index
    %151 = vector.load %arg6[%c64, %c0_57] : memref<96x512xf32, #tpu.memory_space<vmem>>, vector<16x512xf32>
    %152 = arith.truncf %150 : vector<16x128xf32> to vector<16x128xbf16>
    %cst_58 = arith.constant dense<0.000000e+00> : vector<16x512xf32>
    %153 = tpu.matmul %152, %1, %cst_58 {dimension_numbers = #tpu.dot_dimension_numbers<[1], [0], [0], [1], [0, 0, 1, 1], [], []>} : vector<16x128xbf16>, vector<128x512xbf16>, vector<16x512xf32> -> vector<16x512xf32>
    %154 = arith.addf %151, %153 : vector<16x512xf32>
    %155 = vector.extract_strided_slice %154 {offsets = [0, 0], sizes = [16, 128], strides = [1, 1]} : vector<16x512xf32> to vector<16x128xf32>
    %cst_59 = arith.constant 5.000000e-01 : f32
    %156 = vector.broadcast %cst_59 : f32 to vector<16x128xf32>
    %157 = arith.mulf %156, %155 : vector<16x128xf32>
    %158 = math.tanh %157 : vector<16x128xf32>
    %cst_60 = arith.constant 5.000000e-01 : f32
    %159 = vector.broadcast %cst_60 : f32 to vector<16x128xf32>
    %160 = arith.mulf %159, %158 : vector<16x128xf32>
    %cst_61 = arith.constant 5.000000e-01 : f32
    %161 = vector.broadcast %cst_61 : f32 to vector<16x128xf32>
    %162 = arith.addf %160, %161 : vector<16x128xf32>
    %163 = vector.extract_strided_slice %154 {offsets = [0, 128], sizes = [16, 128], strides = [1, 1]} : vector<16x512xf32> to vector<16x128xf32>
    %cst_62 = arith.constant 5.000000e-01 : f32
    %164 = vector.broadcast %cst_62 : f32 to vector<16x128xf32>
    %165 = arith.mulf %164, %163 : vector<16x128xf32>
    %166 = math.tanh %165 : vector<16x128xf32>
    %cst_63 = arith.constant 5.000000e-01 : f32
    %167 = vector.broadcast %cst_63 : f32 to vector<16x128xf32>
    %168 = arith.mulf %167, %166 : vector<16x128xf32>
    %cst_64 = arith.constant 5.000000e-01 : f32
    %169 = vector.broadcast %cst_64 : f32 to vector<16x128xf32>
    %170 = arith.addf %168, %169 : vector<16x128xf32>
    %171 = vector.extract_strided_slice %154 {offsets = [0, 256], sizes = [16, 128], strides = [1, 1]} : vector<16x512xf32> to vector<16x128xf32>
    %172 = math.tanh %171 : vector<16x128xf32>
    %173 = vector.extract_strided_slice %154 {offsets = [0, 384], sizes = [16, 128], strides = [1, 1]} : vector<16x512xf32> to vector<16x128xf32>
    %cst_65 = arith.constant 5.000000e-01 : f32
    %174 = vector.broadcast %cst_65 : f32 to vector<16x128xf32>
    %175 = arith.mulf %174, %173 : vector<16x128xf32>
    %176 = math.tanh %175 : vector<16x128xf32>
    %cst_66 = arith.constant 5.000000e-01 : f32
    %177 = vector.broadcast %cst_66 : f32 to vector<16x128xf32>
    %178 = arith.mulf %177, %176 : vector<16x128xf32>
    %cst_67 = arith.constant 5.000000e-01 : f32
    %179 = vector.broadcast %cst_67 : f32 to vector<16x128xf32>
    %180 = arith.addf %178, %179 : vector<16x128xf32>
    %181 = arith.mulf %170, %148 : vector<16x128xf32>
    %182 = arith.mulf %162, %172 : vector<16x128xf32>
    %183 = arith.addf %181, %182 : vector<16x128xf32>
    %184 = math.tanh %183 : vector<16x128xf32>
    %185 = arith.mulf %180, %184 : vector<16x128xf32>
    %c80 = arith.constant 80 : index
    %c0_68 = arith.constant 0 : index
    %186 = vector.load %arg6[%c80, %c0_68] : memref<96x512xf32, #tpu.memory_space<vmem>>, vector<16x512xf32>
    %187 = arith.truncf %185 : vector<16x128xf32> to vector<16x128xbf16>
    %cst_69 = arith.constant dense<0.000000e+00> : vector<16x512xf32>
    %188 = tpu.matmul %187, %1, %cst_69 {dimension_numbers = #tpu.dot_dimension_numbers<[1], [0], [0], [1], [0, 0, 1, 1], [], []>} : vector<16x128xbf16>, vector<128x512xbf16>, vector<16x512xf32> -> vector<16x512xf32>
    %189 = arith.addf %186, %188 : vector<16x512xf32>
    %190 = vector.extract_strided_slice %189 {offsets = [0, 0], sizes = [16, 128], strides = [1, 1]} : vector<16x512xf32> to vector<16x128xf32>
    %cst_70 = arith.constant 5.000000e-01 : f32
    %191 = vector.broadcast %cst_70 : f32 to vector<16x128xf32>
    %192 = arith.mulf %191, %190 : vector<16x128xf32>
    %193 = math.tanh %192 : vector<16x128xf32>
    %cst_71 = arith.constant 5.000000e-01 : f32
    %194 = vector.broadcast %cst_71 : f32 to vector<16x128xf32>
    %195 = arith.mulf %194, %193 : vector<16x128xf32>
    %cst_72 = arith.constant 5.000000e-01 : f32
    %196 = vector.broadcast %cst_72 : f32 to vector<16x128xf32>
    %197 = arith.addf %195, %196 : vector<16x128xf32>
    %198 = vector.extract_strided_slice %189 {offsets = [0, 128], sizes = [16, 128], strides = [1, 1]} : vector<16x512xf32> to vector<16x128xf32>
    %cst_73 = arith.constant 5.000000e-01 : f32
    %199 = vector.broadcast %cst_73 : f32 to vector<16x128xf32>
    %200 = arith.mulf %199, %198 : vector<16x128xf32>
    %201 = math.tanh %200 : vector<16x128xf32>
    %cst_74 = arith.constant 5.000000e-01 : f32
    %202 = vector.broadcast %cst_74 : f32 to vector<16x128xf32>
    %203 = arith.mulf %202, %201 : vector<16x128xf32>
    %cst_75 = arith.constant 5.000000e-01 : f32
    %204 = vector.broadcast %cst_75 : f32 to vector<16x128xf32>
    %205 = arith.addf %203, %204 : vector<16x128xf32>
    %206 = vector.extract_strided_slice %189 {offsets = [0, 256], sizes = [16, 128], strides = [1, 1]} : vector<16x512xf32> to vector<16x128xf32>
    %207 = math.tanh %206 : vector<16x128xf32>
    %208 = vector.extract_strided_slice %189 {offsets = [0, 384], sizes = [16, 128], strides = [1, 1]} : vector<16x512xf32> to vector<16x128xf32>
    %cst_76 = arith.constant 5.000000e-01 : f32
    %209 = vector.broadcast %cst_76 : f32 to vector<16x128xf32>
    %210 = arith.mulf %209, %208 : vector<16x128xf32>
    %211 = math.tanh %210 : vector<16x128xf32>
    %cst_77 = arith.constant 5.000000e-01 : f32
    %212 = vector.broadcast %cst_77 : f32 to vector<16x128xf32>
    %213 = arith.mulf %212, %211 : vector<16x128xf32>
    %cst_78 = arith.constant 5.000000e-01 : f32
    %214 = vector.broadcast %cst_78 : f32 to vector<16x128xf32>
    %215 = arith.addf %213, %214 : vector<16x128xf32>
    %216 = arith.mulf %205, %183 : vector<16x128xf32>
    %217 = arith.mulf %197, %207 : vector<16x128xf32>
    %218 = arith.addf %216, %217 : vector<16x128xf32>
    %219 = math.tanh %218 : vector<16x128xf32>
    %220 = arith.mulf %215, %219 : vector<16x128xf32>
    %c0_79 = arith.constant 0 : index
    %c0_80 = arith.constant 0 : index
    %221 = vector.load %arg5[%c0_79, %c0_80] : memref<16x128xf32, #tpu.memory_space<vmem>>, vector<16x128xf32>
    tpu.vector_store %arg5[%c0_79, %c0_80], %220 {strides = array<i32>} : memref<16x128xf32, #tpu.memory_space<vmem>>, vector<16x128xf32>,
    return
  }
  func.func @transform_0(%arg0: i32) -> (i32, i32, i32) {
    %c0_i32 = arith.constant 0 : i32
    %c0_i32_0 = arith.constant 0 : i32
    %c0_i32_1 = arith.constant 0 : i32
    return %c0_i32, %arg0, %c0_i32_0 : i32, i32, i32
  }
  func.func @transform_1(%arg0: i32) -> (i32, i32) {
    %c0_i32 = arith.constant 0 : i32
    %c0_i32_0 = arith.constant 0 : i32
    %c0_i32_1 = arith.constant 0 : i32
    return %c0_i32, %c0_i32_0 : i32, i32
  }
  func.func @transform_2(%arg0: i32) -> (i32, i32) {
    %c0_i32 = arith.constant 0 : i32
    %c0_i32_0 = arith.constant 0 : i32
    %c0_i32_1 = arith.constant 0 : i32
    return %c0_i32, %c0_i32_0 : i32, i32
  }
  func.func @transform_3(%arg0: i32) -> (i32, i32) {
    %c0_i32 = arith.constant 0 : i32
    %c0_i32_0 = arith.constant 0 : i32
    %c0_i32_1 = arith.constant 0 : i32
    return %c0_i32, %c0_i32_0 : i32, i32
  }
  func.func @transform_4(%arg0: i32) -> (i32, i32) {
    %c0_i32 = arith.constant 0 : i32
    %c0_i32_0 = arith.constant 0 : i32
    return %arg0, %c0_i32 : i32, i32
  }
}

</mosaic_0001>

<llo_original>
// kernel: tpu_custom_call.1
$region0: #{tpu_custom_call.1}
  #allocation0 [shape = 'u32[]', space=smem, size = 0x4, offset = 0x4, fixed_abs, tag = 'smem constant byte address 0x4 - core index']
  #allocation1 [shape = 'u32[144,128]{1,0:T(1,128)}', space=vmem, size = 0x12000, scoped, tag = 'internal scratch']
  #allocation2 [shape = 'f32[96,512]{1,0:T(8,128)}', space=vmem, size = 0x30000, scoped, tag = 'scratch operand']
  #allocation10 [shape = 's32[]', space=sflag, size = 0x4, offset = 0, fixed_abs, tag = 'sflag constant byte address 0x0 - dummy sync flag']
  %s0 = inlined_call_operand.hbm [shape: bf16[6,32,64], index: 0, kind: input, shape index: {}]
  %s1 = inlined_call_operand.hbm [shape: bf16[64,512], index: 1, kind: input, shape index: {}]
  %s2 = inlined_call_operand.hbm [shape: bf16[128,512], index: 2, kind: input, shape index: {}]
  %s3 = inlined_call_operand.vmem [shape: f32[1,512], index: 3, kind: input, shape index: {}]
  %s4 = inlined_call_operand.hbm [shape: f32[32,128], index: 4, kind: output, shape index: {}]
  %s5 = sld [smem:[#allocation0]]
  $region61: #{tpu_custom_call.1} parent=0
    _
  %s7 = ssub.s32 1, %s5
  %s8 = scalar_select 0, %s7, %s5
  $region1: #{tpu_custom_call.1} parent=0
    #allocation3 [shape = 'u8[49152]{0}', space=vmem, size = 0xc000, scoped, tag = 'input window, operand 0']
    #allocation4 [shape = 's32[2]{0}', space=sflag, size = 0x8, scoped, tag = 'scoped memory for tpu_custom_call.1']
    #allocation5 [shape = 's32[2]{0}', space=sflag, size = 0x8, scoped, tag = 'scoped memory for tpu_custom_call.1']
    #allocation6 [shape = 'u8[65536]{0}', space=vmem, size = 0x10000, scoped, tag = 'input window, operand 1, single buffered']
    #allocation7 [shape = 's32[1]{0}', space=sflag, size = 0x4, scoped, tag = 'scoped memory for tpu_custom_call.1']
    #allocation8 [shape = 'u8[131072]{0}', space=vmem, size = 0x20000, scoped, tag = 'input window, operand 2, single buffered']
    #allocation9 [shape = 'u8[16384]{0}', space=vmem, size = 0x4000, scoped, tag = 'output window, operand 0']
    %9 = vsyncpa [#allocation4], 0
    %s10 = scalar_lea.sflag [#allocation4], 1
    %11 = vsyncpa %s10, 0
    %12 = vsyncpa [#allocation7], 0
    %13 = vsyncpa [#allocation5], 0
    %s14 = scalar_lea.sflag [#allocation5], 1
    %15 = vsyncpa %s14, 0
    loop: start=0, step=1, limit=4
    $region2: #{tpu_custom_call.1} parent=1 // loop_pre_header
      _
    $region3: #{tpu_custom_call.1} parent=1 // loop_header
      %s17 = sphi 0, %s21
      %p18 = scmp.ge.s32.totalorder %s17, 4
      %s27 = sphi 0, %s29
      %s30 = sphi 0, %s27
      %s31 = sphi 0, %s30
      %s47 = sphi 0, %s31
      %s51 = sphi 0, %s51
      %s53 = sphi 0, %s51
      %s54 = sphi 0, %s53
      %s68 = sphi 0, %s54
      %s72 = sphi 0, %s72
      %s74 = sphi 0, %s72
      %s75 = sphi 0, %s74
      %s89 = sphi 0, %s75
      %s93 = sphi 0, %s93
      %s95 = sphi 0, %s93
      %s96 = sphi 0, %s95
      %s110 = sphi 0, %s96
      %s116 = sphi 0, %s118
      %s119 = sphi 0, %s116
      %s120 = sphi 0, %s119
      %s136 = sphi 0, %s120
    $region4: #{tpu_custom_call.1} parent=1 // loop_header_branch
      %20 = sbr.rel (%p18) target = $region8
    $region5: #{tpu_custom_call.1} parent=1 // loop_body
      %s22 = ssub.s32 %s17, 1
      %s23 = ssub.s32 %s17, 2
      %s24 = sadd.s32 %s17, 1
      %s25 = ssub.s32 %s17, %s24
      %p26 = scmp.eq.s32.totalorder %s25, 0
      %s28 = sadd.s32 %s27, 1
      %s29 = scalar_select %p26, %s27, %s28
      %p32 = pneg %p26
      %p33 = scmp.eq.s32.totalorder %s17, 1
      %p34 = por %p32, %p33
      %p35 = scmp.ne.s32.totalorder %s27, %s30
      %p36 = scmp.eq.s32.totalorder %s17, 0
      %p37 = por %p35, %p36
      %p38 = scmp.ne.s32.totalorder %s27, %s30
      %p39 = scmp.eq.s32.totalorder %s22, 1
      %p40 = por %p38, %p39
      %p41 = scmp.ne.s32.totalorder %s30, %s31
      %p42 = scmp.eq.s32.totalorder %s22, 0
      %p43 = por %p41, %p42
      %p44 = scmp.ne.s32.totalorder %s30, %s31
      %p45 = scmp.eq.s32.totalorder %s23, 1
      %p46 = por %p44, %p45
      %p48 = scmp.ne.s32.totalorder %s31, %s47
      %p49 = scmp.eq.s32.totalorder %s23, 0
      %p50 = por %p48, %p49
      %s52 = sadd.s32 %s51, 1
      %p55 = scmp.eq.s32.totalorder %s17, 1
      %p56 = scmp.ne.s32.totalorder %s51, %s53
      %p57 = scmp.eq.s32.totalorder %s17, 0
      %p58 = por %p56, %p57
      %p59 = scmp.ne.s32.totalorder %s51, %s53
      %p60 = scmp.eq.s32.totalorder %s22, 1
      %p61 = por %p59, %p60
      %p62 = scmp.ne.s32.totalorder %s53, %s54
      %p63 = scmp.eq.s32.totalorder %s22, 0
      %p64 = por %p62, %p63
      %p65 = scmp.ne.s32.totalorder %s53, %s54
      %p66 = scmp.eq.s32.totalorder %s23, 1
      %p67 = por %p65, %p66
      %p69 = scmp.ne.s32.totalorder %s54, %s68
      %p70 = scmp.eq.s32.totalorder %s23, 0
      %p71 = por %p69, %p70
      %s73 = sadd.s32 %s72, 1
      %p76 = scmp.eq.s32.totalorder %s17, 1
      %p77 = scmp.ne.s32.totalorder %s72, %s74
      %p78 = scmp.eq.s32.totalorder %s17, 0
      %p79 = por %p77, %p78
      %p80 = scmp.ne.s32.totalorder %s72, %s74
      %p81 = scmp.eq.s32.totalorder %s22, 1
      %p82 = por %p80, %p81
      %p83 = scmp.ne.s32.totalorder %s74, %s75
      %p84 = scmp.eq.s32.totalorder %s22, 0
      %p85 = por %p83, %p84
      %p86 = scmp.ne.s32.totalorder %s74, %s75
      %p87 = scmp.eq.s32.totalorder %s23, 1
      %p88 = por %p86, %p87
      %p90 = scmp.ne.s32.totalorder %s75, %s89
      %p91 = scmp.eq.s32.totalorder %s23, 0
      %p92 = por %p90, %p91
      %s94 = sadd.s32 %s93, 1
      %p97 = scmp.eq.s32.totalorder %s17, 1
      %p98 = scmp.ne.s32.totalorder %s93, %s95
      %p99 = scmp.eq.s32.totalorder %s17, 0
      %p100 = por %p98, %p99
      %p101 = scmp.ne.s32.totalorder %s93, %s95
      %p102 = scmp.eq.s32.totalorder %s22, 1
      %p103 = por %p101, %p102
      %p104 = scmp.ne.s32.totalorder %s95, %s96
      %p105 = scmp.eq.s32.totalorder %s22, 0
      %p106 = por %p104, %p105
      %p107 = scmp.ne.s32.totalorder %s95, %s96
      %p108 = scmp.eq.s32.totalorder %s23, 1
      %p109 = por %p107, %p108
      %p111 = scmp.ne.s32.totalorder %s96, %s110
      %p112 = scmp.eq.s32.totalorder %s23, 0
      %p113 = por %p111, %p112
      %s114 = ssub.s32 %s17, %s24
      %p115 = scmp.eq.s32.totalorder %s114, 0
      %s117 = sadd.s32 %s116, 1
      %s118 = scalar_select %p115, %s116, %s117
      %p121 = pneg %p115
      %p122 = scmp.eq.s32.totalorder %s17, 1
      %p123 = por %p121, %p122
      %p124 = scmp.ne.s32.totalorder %s116, %s119
      %p125 = scmp.eq.s32.totalorder %s17, 0
      %p126 = por %p124, %p125
      %p127 = scmp.ne.s32.totalorder %s116, %s119
      %p128 = scmp.eq.s32.totalorder %s22, 1
      %p129 = por %p127, %p128
      %p130 = scmp.ne.s32.totalorder %s119, %s120
      %p131 = scmp.eq.s32.totalorder %s22, 0
      %p132 = por %p130, %p131
      %p133 = scmp.ne.s32.totalorder %s119, %s120
      %p134 = scmp.eq.s32.totalorder %s23, 1
      %p135 = por %p133, %p134
      %p137 = scmp.ne.s32.totalorder %s120, %s136
      %p138 = scmp.eq.s32.totalorder %s23, 0
      %p139 = por %p137, %p138
      %p140 = scmp.le.s32.totalorder 1, %s17
      %p141 = scmp.lt.s32.totalorder %s17, 3
      %p142 = pnand %p140, %p141
      %p143 = pneg %p142
      // Predicated region
      $region9: #{tpu_custom_call.1} parent=5 // pred_check
        _
      $region10: #{tpu_custom_call.1} parent=5 // pred_check_branch
        %145 = sbr.rel (%p142) target = $region12
      $region11: #{tpu_custom_call.1} parent=5 // pred_region
        %s146 = ssub.s32 %s17, 1
        // Predicated region
        $region13: #{tpu_custom_call.1} parent=11 // pred_check
          %p147 = pneg %p64
        $region14: #{tpu_custom_call.1} parent=11 // pred_check_branch
          %149 = sbr.rel (%p147) target = $region16
        $region15: #{tpu_custom_call.1} parent=11 // pred_region
          %s151 = ssub.s32 2048, 2048
          %152 = vsyncadd [#allocation7], %s151
          %s153 = sshll.u32 [#allocation6], 4
          %s154 = int_to_ptr.vmem [resolvable:$true] %s153
          %159 = dma.hbm_to_vmem [thread:$0]  %s1, 2048, %s154, [#allocation7], 256, 256, 16
        $region16: #{tpu_custom_call.1} parent=11 // pred_fallthru
          _
        // Predicated region
        $region17: #{tpu_custom_call.1} parent=11 // pred_check
          %p160 = pneg %p85
        $region18: #{tpu_custom_call.1} parent=11 // pred_check_branch
          %162 = sbr.rel (%p160) target = $region20
        $region19: #{tpu_custom_call.1} parent=11 // pred_region
          %s164 = ssub.s32 4096, 4096
          %165 = vsyncadd [#allocation7], %s164
          %s166 = sshll.u32 [#allocation8], 4
          %s167 = int_to_ptr.vmem [resolvable:$true] %s166
          %172 = dma.hbm_to_vmem [thread:$0]  %s2, 4096, %s167, [#allocation7], 256, 256, 16
        $region20: #{tpu_custom_call.1} parent=11 // pred_fallthru
          _
        // Predicated region
        $region21: #{tpu_custom_call.1} parent=11 // pred_check
          %p173 = pneg %p106
        $region22: #{tpu_custom_call.1} parent=11 // pred_check_branch
          %175 = sbr.rel (%p173) target = $region24
        $region23: #{tpu_custom_call.1} parent=11 // pred_region
          _
        $region24: #{tpu_custom_call.1} parent=11 // pred_fallthru
          _
      $region12: #{tpu_custom_call.1} parent=5 // pred_fallthru
        _
      %p176 = scmp.lt.s32.totalorder %s17, 2
      // Predicated region
      $region25: #{tpu_custom_call.1} parent=5 // pred_check
        %p177 = pneg %p176
      $region26: #{tpu_custom_call.1} parent=5 // pred_check_branch
        %179 = sbr.rel (%p177) target = $region28
      $region27: #{tpu_custom_call.1} parent=5 // pred_region
        // Predicated region
        $region29: #{tpu_custom_call.1} parent=27 // pred_check
          %p180 = pneg %p37
        $region30: #{tpu_custom_call.1} parent=27 // pred_check_branch
          %182 = sbr.rel (%p180) target = $region32
        $region31: #{tpu_custom_call.1} parent=27 // pred_region
          #allocation11 [shape = 'u32[6]{0}', space=smem, size = 0x18, scoped, tag = 'DMA stride descriptor']
          %s183 = sand.u32 %s27, 1
          %s184 = scalar_lea.sflag [#allocation4], %s183
          %s185 = sand.u32 %s27, 1
          %s186 = smul.addr %s185, 48
          %s187 = scalar_lea.vmem [#allocation3], %s186
          %s188 = smul.u32 2, %s17
          %s190 = ssub.s32 768, 768
          %191 = vsyncadd %s184, %s190
          %s192 = smul.addr %s188, 64
          %s193 = scalar_lea.hbm %s0, %s192
          %s195 = sshll.u32 1, 14
          %s196 = sxor.u32 4294967295, %s195
          %s198 = sld [smem:[#allocation0]]
          %s199 = sadd.s32 2, %s198
          %s201 = sshll.u32 7, 26
          %s202 = sxor.u32 4294967295, %s201
          %s203 = sand.u32 0, %s202
          %s204 = sshll.u32 %s199, 26
          %s205 = sor.u32 %s203, %s204
          %s206 = sshll.u32 %s187, 4
          %s207 = int_to_ptr.vmem [resolvable:$true] %s206
          %213 = sst [smem:[#allocation11]] 256
          %s214 = scalar_lea.smem [#allocation11], 1
          %215 = sst [smem:[%s214]] 128
          %s216 = scalar_lea.smem [#allocation11], 2
          %217 = sst [smem:[%s216]] 2
          %s218 = scalar_lea.smem [#allocation11], 3
          %219 = sst [smem:[%s218]] 64
          %s220 = scalar_lea.smem [#allocation11], 4
          %221 = sst [smem:[%s220]] 64
          %s222 = scalar_lea.smem [#allocation11], 5
          %223 = sst [smem:[%s222]] 4
          %225 = dma.general %s193, 768, %s207, %s184, 131072, [#allocation11], %s205, 0
        $region32: #{tpu_custom_call.1} parent=27 // pred_fallthru
          _
      $region28: #{tpu_custom_call.1} parent=5 // pred_fallthru
        _
      %p226 = scmp.le.s32.totalorder 1, %s17
      %p227 = scmp.lt.s32.totalorder %s17, 3
      %p228 = pnand %p226, %p227
      %p229 = pneg %p228
      // Predicated region
      $region33: #{tpu_custom_call.1} parent=5 // pred_check
        _
      $region34: #{tpu_custom_call.1} parent=5 // pred_check_branch
        %231 = sbr.rel (%p228) target = $region36
      $region35: #{tpu_custom_call.1} parent=5 // pred_region
        %s232 = ssub.s32 %s17, 1
        %s233 = sand.u32 %s30, 1
        %s234 = scalar_lea.sflag [#allocation4], %s233
        %s235 = sand.u32 %s30, 1
        %s236 = smul.addr %s235, 48
        %s237 = scalar_lea.vmem [#allocation3], %s236
        // Predicated region
        $region37: #{tpu_custom_call.1} parent=35 // pred_check
          %p238 = pneg %p43
        $region38: #{tpu_custom_call.1} parent=35 // pred_check_branch
          %240 = sbr.rel (%p238) target = $region40
        $region39: #{tpu_custom_call.1} parent=35 // pred_region
          %241 = dma.done %s234, 768
        $region40: #{tpu_custom_call.1} parent=35 // pred_fallthru
          _
        // Predicated region
        $region41: #{tpu_custom_call.1} parent=35 // pred_check
          %p242 = pneg %p64
        $region42: #{tpu_custom_call.1} parent=35 // pred_check_branch
          %244 = sbr.rel (%p242) target = $region44
        $region43: #{tpu_custom_call.1} parent=35 // pred_region
          %245 = dma.done [#allocation7], 2048
        $region44: #{tpu_custom_call.1} parent=35 // pred_fallthru
          _
        // Predicated region
        $region45: #{tpu_custom_call.1} parent=35 // pred_check
          %p246 = pneg %p85
        $region46: #{tpu_custom_call.1} parent=35 // pred_check_branch
          %248 = sbr.rel (%p246) target = $region48
        $region47: #{tpu_custom_call.1} parent=35 // pred_region
          %249 = dma.done [#allocation7], 4096
        $region48: #{tpu_custom_call.1} parent=35 // pred_fallthru
          _
        %s250 = sand.u32 %s30, 1
        %s251 = scalar_lea.sflag [#allocation4], %s250
        %s252 = sand.u32 %s30, 1
        %s253 = smul.addr %s252, 48
        %s254 = scalar_lea.vmem [#allocation3], %s253
        %p255 = pneg %p43
        %p256 = pneg %p40
        %p257 = pneg %p64
        %p258 = pneg %p61
        %p259 = pneg %p85
        %p260 = pneg %p82
        %p261 = pneg %p106
        %p262 = pneg %p103
        %p263 = pneg %p132
        %p264 = pneg %p129
        %s265 = sand.u32 %s119, 1
        %s266 = scalar_lea.sflag [#allocation5], %s265
        %s267 = sand.u32 %s119, 1
        %s268 = smul.addr %s267, 16
        %s269 = scalar_lea.vmem [#allocation9], %s268
        %s270 = smul.u32 2, %s22
        %s271 = smul.u32 2, %s22
        %v273 = vld [vmem:[#allocation6] sm:$0xff]
        %v274 = vld [vmem:[#allocation6 + $0x8] sm:$0xff]
        %v275 = vld [vmem:[#allocation6 + $0x10] sm:$0xff]
        %v276 = vld [vmem:[#allocation6 + $0x18] sm:$0xff]
        %v277 = vld [vmem:[#allocation6 + $0x20] sm:$0xff]
        %v278 = vld [vmem:[#allocation6 + $0x28] sm:$0xff]
        %v279 = vld [vmem:[#allocation6 + $0x30] sm:$0xff]
        %v280 = vld [vmem:[#allocation6 + $0x38] sm:$0xff]
        %v281 = vld [vmem:[#allocation6 + $0x40] sm:$0xff]
        %v282 = vld [vmem:[#allocation6 + $0x48] sm:$0xff]
        %v283 = vld [vmem:[#allocation6 + $0x50] sm:$0xff]
        %v284 = vld [vmem:[#allocation6 + $0x58] sm:$0xff]
        %v285 = vld [vmem:[#allocation6 + $0x60] sm:$0xff]
        %v286 = vld [vmem:[#allocation6 + $0x68] sm:$0xff]
        %v287 = vld [vmem:[#allocation6 + $0x70] sm:$0xff]
        %v288 = vld [vmem:[#allocation6 + $0x78] sm:$0xff]
        %v289 = vld [vmem:[#allocation8] sm:$0xff]
        %v290 = vld [vmem:[#allocation8 + $0x8] sm:$0xff]
        %v291 = vld [vmem:[#allocation8 + $0x10] sm:$0xff]
        %v292 = vld [vmem:[#allocation8 + $0x18] sm:$0xff]
        %v293 = vld [vmem:[#allocation8 + $0x20] sm:$0xff]
        %v294 = vld [vmem:[#allocation8 + $0x28] sm:$0xff]
        %v295 = vld [vmem:[#allocation8 + $0x30] sm:$0xff]
        %v296 = vld [vmem:[#allocation8 + $0x38] sm:$0xff]
        %v297 = vld [vmem:[#allocation8 + $0x40] sm:$0xff]
        %v298 = vld [vmem:[#allocation8 + $0x48] sm:$0xff]
        %v299 = vld [vmem:[#allocation8 + $0x50] sm:$0xff]
        %v300 = vld [vmem:[#allocation8 + $0x58] sm:$0xff]
        %v301 = vld [vmem:[#allocation8 + $0x60] sm:$0xff]
        %v302 = vld [vmem:[#allocation8 + $0x68] sm:$0xff]
        %v303 = vld [vmem:[#allocation8 + $0x70] sm:$0xff]
        %v304 = vld [vmem:[#allocation8 + $0x78] sm:$0xff]
        %v305 = vld [vmem:[#allocation8 + $0x80] sm:$0xff]
        %v306 = vld [vmem:[#allocation8 + $0x88] sm:$0xff]
        %v307 = vld [vmem:[#allocation8 + $0x90] sm:$0xff]
        %v308 = vld [vmem:[#allocation8 + $0x98] sm:$0xff]
        %v309 = vld [vmem:[#allocation8 + $0xa0] sm:$0xff]
        %v310 = vld [vmem:[#allocation8 + $0xa8] sm:$0xff]
        %v311 = vld [vmem:[#allocation8 + $0xb0] sm:$0xff]
        %v312 = vld [vmem:[#allocation8 + $0xb8] sm:$0xff]
        %v313 = vld [vmem:[#allocation8 + $0xc0] sm:$0xff]
        %v314 = vld [vmem:[#allocation8 + $0xc8] sm:$0xff]
        %v315 = vld [vmem:[#allocation8 + $0xd0] sm:$0xff]
        %v316 = vld [vmem:[#allocation8 + $0xd8] sm:$0xff]
        %v317 = vld [vmem:[#allocation8 + $0xe0] sm:$0xff]
        %v318 = vld [vmem:[#allocation8 + $0xe8] sm:$0xff]
        %v319 = vld [vmem:[#allocation8 + $0xf0] sm:$0xff]
        %v320 = vld [vmem:[#allocation8 + $0xf8] sm:$0xff]
        %v321 = vld [vmem:[%s237] sm:$0xf]
        %v322 = vld [vmem:[%s237 + $0x4] sm:$0xf]
        %v323 = vld [vmem:[%s237 + $0x8] sm:$0xf]
        %v324 = vld [vmem:[%s237 + $0xc] sm:$0xf]
        %v325 = vld [vmem:[%s237 + $0x10] sm:$0xf]
        %v326 = vld [vmem:[%s237 + $0x14] sm:$0xf]
        %v327 = vld [vmem:[%s237 + $0x18] sm:$0xf]
        %v328 = vld [vmem:[%s237 + $0x1c] sm:$0xf]
        %v329 = vld [vmem:[%s237 + $0x20] sm:$0xf]
        %v330 = vld [vmem:[%s237 + $0x24] sm:$0xf]
        %v331 = vld [vmem:[%s237 + $0x28] sm:$0xf]
        %v332 = vld [vmem:[%s237 + $0x2c] sm:$0xf]
        %v333 = vld [vmem:[%s3] sm:$0xf]
        %v335 = vlaneseq
        %v336 = vshrl.u32 %v335, 7
        %v337 = vsub.s32 0, %v336
        %v338 = vrot.slane %v333, %v337
        %v339 = vlaneseq
        %v340 = vshrl.u32 %v339, 7
        %v341 = vsub.s32 1, %v340
        %v342 = vrot.slane %v333, %v341
        %v343 = vlaneseq
        %v344 = vshrl.u32 %v343, 7
        %v345 = vsub.s32 2, %v344
        %v346 = vrot.slane %v333, %v345
        %v347 = vlaneseq
        %v348 = vshrl.u32 %v347, 7
        %v349 = vsub.s32 3, %v348
        %v350 = vrot.slane %v333, %v349
        %v367 = vunpack.c.l.b16 %v321
        %v368 = vunpack.c.l.b16 %v322
        %v369 = vunpack.c.l.b16 %v323
        %v370 = vunpack.c.l.b16 %v324
        %v371 = vunpack.c.l.b16 %v325
        %v372 = vunpack.c.l.b16 %v326
        %v373 = vunpack.c.l.b16 %v327
        %v374 = vunpack.c.l.b16 %v328
        %v375 = vunpack.c.l.b16 %v329
        %v376 = vunpack.c.l.b16 %v330
        %v377 = vunpack.c.l.b16 %v331
        %v378 = vunpack.c.l.b16 %v332
        %v379 = vpack.c.b16 %v368, %v367
        %v380 = vpack.c.b16 %v370, %v369
        %v381 = vpack.c.b16 %v372, %v371
        %v382 = vpack.c.b16 %v374, %v373
        %v383 = vpack.c.b16 %v376, %v375
        %v384 = vpack.c.b16 %v378, %v377
        %v401 = vunpack.c.l.b16 %v273
        %v402 = vunpack.c.h.b16 %v273
        %v403 = vunpack.c.l.b16 %v274
        %v404 = vunpack.c.h.b16 %v274
        %v405 = vunpack.c.l.b16 %v275
        %v406 = vunpack.c.h.b16 %v275
        %v407 = vunpack.c.l.b16 %v276
        %v408 = vunpack.c.h.b16 %v276
        %v409 = vunpack.c.l.b16 %v277
        %v410 = vunpack.c.h.b16 %v277
        %v411 = vunpack.c.l.b16 %v278
        %v412 = vunpack.c.h.b16 %v278
        %v413 = vunpack.c.l.b16 %v279
        %v414 = vunpack.c.h.b16 %v279
        %v415 = vunpack.c.l.b16 %v280
        %v416 = vunpack.c.h.b16 %v280
        %v417 = vunpack.c.l.b16 %v281
        %v418 = vunpack.c.h.b16 %v281
        %v419 = vunpack.c.l.b16 %v282
        %v420 = vunpack.c.h.b16 %v282
        %v421 = vunpack.c.l.b16 %v283
        %v422 = vunpack.c.h.b16 %v283
        %v423 = vunpack.c.l.b16 %v284
        %v424 = vunpack.c.h.b16 %v284
        %v425 = vunpack.c.l.b16 %v285
        %v426 = vunpack.c.h.b16 %v285
        %v427 = vunpack.c.l.b16 %v286
        %v428 = vunpack.c.h.b16 %v286
        %v429 = vunpack.c.l.b16 %v287
        %v430 = vunpack.c.h.b16 %v287
        %v431 = vunpack.c.l.b16 %v288
        %v432 = vunpack.c.h.b16 %v288
        %v433 = vpack.c.b16 %v405, %v401
        %v434 = vpack.c.b16 %v406, %v402
        %v435 = vpack.c.b16 %v407, %v403
        %v436 = vpack.c.b16 %v408, %v404
        %v437 = vpack.c.b16 %v413, %v409
        %v438 = vpack.c.b16 %v414, %v410
        %v439 = vpack.c.b16 %v415, %v411
        %v440 = vpack.c.b16 %v416, %v412
        %v441 = vpack.c.b16 %v421, %v417
        %v442 = vpack.c.b16 %v422, %v418
        %v443 = vpack.c.b16 %v423, %v419
        %v444 = vpack.c.b16 %v424, %v420
        %v445 = vpack.c.b16 %v429, %v425
        %v446 = vpack.c.b16 %v430, %v426
        %v447 = vpack.c.b16 %v431, %v427
        %v448 = vpack.c.b16 %v432, %v428
        %vm465 = vcmask 523264
        %v467 = vsel %vm465, %v379, 0
        %v470 = vsel %vm465, %v380, 0
        %v473 = vsel %vm465, %v381, 0
        %v476 = vsel %vm465, %v382, 0
        %v479 = vsel %vm465, %v383, 0
        %v482 = vsel %vm465, %v384, 0
        %484 = vmatprep.subr.bf16.mxu0 0
        %485 = vmatpush1.bf16.msra.mxu0 0
        %486 = vmatprep.subr.bf16.mxu0 0
        %487 = vmatpush1.bf16.msra.mxu0 0
        %488 = vmatprep.subr.bf16.mxu0 0
        %489 = vmatpush1.bf16.msra.mxu0 0
        %490 = vmatprep.subr.bf16.mxu0 0
        %491 = vmatpush1.bf16.msra.mxu0 0
        %492 = vmatprep.subr.bf16.mxu0 %v446
        %493 = vmatpush1.bf16.msra.mxu0 %v445
        %494 = vmatprep.subr.bf16.mxu0 %v442
        %495 = vmatpush1.bf16.msra.mxu0 %v441
        %496 = vmatprep.subr.bf16.mxu0 %v438
        %497 = vmatpush1.bf16.msra.mxu0 %v437
        %498 = vmatprep.subr.bf16.mxu0 %v434
        %499 = vmatpush1.bf16.msra.mxu0 %v433
        %500 = vmatprep.subr.bf16.mxu0 0
        %501 = vmatpush2.bf16.msra.mxu0 0
        %502 = vmatprep.subr.bf16.mxu0 0
        %503 = vmatpush2.bf16.msra.mxu0 0
        %504 = vmatprep.subr.bf16.mxu0 0
        %505 = vmatpush2.bf16.msra.mxu0 0
        %506 = vmatprep.subr.bf16.mxu0 0
        %507 = vmatpush2.bf16.msra.mxu0 0
        %508 = vmatprep.subr.bf16.mxu0 0
        %509 = vmatpush2.bf16.msra.mxu0 0
        %510 = vmatprep.subr.bf16.mxu0 0
        %511 = vmatpush2.bf16.msra.mxu0 0
        %512 = vmatprep.subr.bf16.mxu0 0
        %513 = vmatpush2.bf16.msra.mxu0 0
        %514 = vmatprep.subr.bf16.mxu0 0
        %515 = vmatpush2.bf16.msra.mxu0 0
        %516 = vmatprep.mubr.bf16.mxu0 0
        %517 = vmatmul.mubr.bf16.gmra.mxu0 %v467
        %v518 = vpop.f32.mrf.mxu0
        %v519 = vadd.f32 %v338, %v518
        %v520 = vpop.f32.mrf.mxu0
        %v521 = vadd.f32 %v342, %v520
        %v522 = vpop.f32.mrf.mxu0
        %v523 = vadd.f32 %v338, %v522
        %v524 = vpop.f32.mrf.mxu0
        %v525 = vadd.f32 %v342, %v524
        %526 = vmatprep.mubr.bf16.mxu0 0
        %527 = vmatmul.mubr.bf16.gmra.mxu0 %v470
        %v528 = vpop.f32.mrf.mxu0
        %v529 = vadd.f32 %v338, %v528
        %v530 = vpop.f32.mrf.mxu0
        %v531 = vadd.f32 %v342, %v530
        %v532 = vpop.f32.mrf.mxu0
        %v533 = vadd.f32 %v338, %v532
        %v534 = vpop.f32.mrf.mxu0
        %v535 = vadd.f32 %v342, %v534
        %536 = vmatprep.mubr.bf16.mxu0 0
        %537 = vmatmul.mubr.bf16.gmra.mxu0 %v473
        %v538 = vpop.f32.mrf.mxu0
        %v539 = vadd.f32 %v338, %v538
        %v540 = vpop.f32.mrf.mxu0
        %v541 = vadd.f32 %v342, %v540
        %v542 = vpop.f32.mrf.mxu0
        %v543 = vadd.f32 %v338, %v542
        %v544 = vpop.f32.mrf.mxu0
        %v545 = vadd.f32 %v342, %v544
        %546 = vmatprep.mubr.bf16.mxu0 0
        %547 = vmatmul.mubr.bf16.gmra.mxu0 %v476
        %v548 = vpop.f32.mrf.mxu0
        %v549 = vadd.f32 %v338, %v548
        %v550 = vpop.f32.mrf.mxu0
        %v551 = vadd.f32 %v342, %v550
        %v552 = vpop.f32.mrf.mxu0
        %v553 = vadd.f32 %v338, %v552
        %v554 = vpop.f32.mrf.mxu0
        %v555 = vadd.f32 %v342, %v554
        %556 = vmatprep.mubr.bf16.mxu0 0
        %557 = vmatmul.mubr.bf16.gmra.mxu0 %v479
        %v558 = vpop.f32.mrf.mxu0
        %v559 = vadd.f32 %v338, %v558
        %v560 = vpop.f32.mrf.mxu0
        %v561 = vadd.f32 %v342, %v560
        %v562 = vpop.f32.mrf.mxu0
        %v563 = vadd.f32 %v338, %v562
        %v564 = vpop.f32.mrf.mxu0
        %v565 = vadd.f32 %v342, %v564
        %566 = vmatprep.mubr.bf16.mxu0 0
        %567 = vmatmul.mubr.bf16.gmra.mxu0 %v482
        %v568 = vpop.f32.mrf.mxu0
        %v569 = vadd.f32 %v338, %v568
        %v570 = vpop.f32.mrf.mxu0
        %v571 = vadd.f32 %v342, %v570
        %v572 = vpop.f32.mrf.mxu0
        %v573 = vadd.f32 %v338, %v572
        %v574 = vpop.f32.mrf.mxu0
        %v575 = vadd.f32 %v342, %v574
        %576 = vdwg.mxu0
        %577 = vmatprep.subr.bf16.mxu0 0
        %578 = vmatpush1.bf16.msra.mxu0 0
        %579 = vmatprep.subr.bf16.mxu0 0
        %580 = vmatpush1.bf16.msra.mxu0 0
        %581 = vmatprep.subr.bf16.mxu0 0
        %582 = vmatpush1.bf16.msra.mxu0 0
        %583 = vmatprep.subr.bf16.mxu0 0
        %584 = vmatpush1.bf16.msra.mxu0 0
        %585 = vmatprep.subr.bf16.mxu0 %v448
        %586 = vmatpush1.bf16.msra.mxu0 %v447
        %587 = vmatprep.subr.bf16.mxu0 %v444
        %588 = vmatpush1.bf16.msra.mxu0 %v443
        %589 = vmatprep.subr.bf16.mxu0 %v440
        %590 = vmatpush1.bf16.msra.mxu0 %v439
        %591 = vmatprep.subr.bf16.mxu0 %v436
        %592 = vmatpush1.bf16.msra.mxu0 %v435
        %593 = vmatprep.subr.bf16.mxu0 0
        %594 = vmatpush2.bf16.msra.mxu0 0
        %595 = vmatprep.subr.bf16.mxu0 0
        %596 = vmatpush2.bf16.msra.mxu0 0
        %597 = vmatprep.subr.bf16.mxu0 0
        %598 = vmatpush2.bf16.msra.mxu0 0
        %599 = vmatprep.subr.bf16.mxu0 0
        %600 = vmatpush2.bf16.msra.mxu0 0
        %601 = vmatprep.subr.bf16.mxu0 0
        %602 = vmatpush2.bf16.msra.mxu0 0
        %603 = vmatprep.subr.bf16.mxu0 0
        %604 = vmatpush2.bf16.msra.mxu0 0
        %605 = vmatprep.subr.bf16.mxu0 0
        %606 = vmatpush2.bf16.msra.mxu0 0
        %607 = vmatprep.subr.bf16.mxu0 0
        %608 = vmatpush2.bf16.msra.mxu0 0
        %609 = vmatprep.mubr.bf16.mxu0 0
        %610 = vmatmul.mubr.bf16.gmra.mxu0 %v467
        %v611 = vpop.f32.mrf.mxu0
        %v612 = vadd.f32 %v346, %v611
        %v613 = vpop.f32.mrf.mxu0
        %v614 = vadd.f32 %v350, %v613
        %v615 = vpop.f32.mrf.mxu0
        %v616 = vadd.f32 %v346, %v615
        %v617 = vpop.f32.mrf.mxu0
        %v618 = vadd.f32 %v350, %v617
        %619 = vmatprep.mubr.bf16.mxu0 0
        %620 = vmatmul.mubr.bf16.gmra.mxu0 %v470
        %v621 = vpop.f32.mrf.mxu0
        %v622 = vadd.f32 %v346, %v621
        %v623 = vpop.f32.mrf.mxu0
        %v624 = vadd.f32 %v350, %v623
        %v625 = vpop.f32.mrf.mxu0
        %v626 = vadd.f32 %v346, %v625
        %v627 = vpop.f32.mrf.mxu0
        %v628 = vadd.f32 %v350, %v627
        %629 = vmatprep.mubr.bf16.mxu0 0
        %630 = vmatmul.mubr.bf16.gmra.mxu0 %v473
        %v631 = vpop.f32.mrf.mxu0
        %v632 = vadd.f32 %v346, %v631
        %v633 = vpop.f32.mrf.mxu0
        %v634 = vadd.f32 %v350, %v633
        %v635 = vpop.f32.mrf.mxu0
        %v636 = vadd.f32 %v346, %v635
        %v637 = vpop.f32.mrf.mxu0
        %v638 = vadd.f32 %v350, %v637
        %639 = vmatprep.mubr.bf16.mxu0 0
        %640 = vmatmul.mubr.bf16.gmra.mxu0 %v476
        %v641 = vpop.f32.mrf.mxu0
        %v642 = vadd.f32 %v346, %v641
        %v643 = vpop.f32.mrf.mxu0
        %v644 = vadd.f32 %v350, %v643
        %v645 = vpop.f32.mrf.mxu0
        %v646 = vadd.f32 %v346, %v645
        %v647 = vpop.f32.mrf.mxu0
        %v648 = vadd.f32 %v350, %v647
        %649 = vmatprep.mubr.bf16.mxu0 0
        %650 = vmatmul.mubr.bf16.gmra.mxu0 %v479
        %v651 = vpop.f32.mrf.mxu0
        %v652 = vadd.f32 %v346, %v651
        %v653 = vpop.f32.mrf.mxu0
        %v654 = vadd.f32 %v350, %v653
        %v655 = vpop.f32.mrf.mxu0
        %v656 = vadd.f32 %v346, %v655
        %v657 = vpop.f32.mrf.mxu0
        %v658 = vadd.f32 %v350, %v657
        %659 = vmatprep.mubr.bf16.mxu0 0
        %660 = vmatmul.mubr.bf16.gmra.mxu0 %v482
        %v661 = vpop.f32.mrf.mxu0
        %v662 = vadd.f32 %v346, %v661
        %v663 = vpop.f32.mrf.mxu0
        %v664 = vadd.f32 %v350, %v663
        %v665 = vpop.f32.mrf.mxu0
        %v666 = vadd.f32 %v346, %v665
        %v667 = vpop.f32.mrf.mxu0
        %v668 = vadd.f32 %v350, %v667
        %669 = vdwg.mxu0
        %670 = vst [vmem:[#allocation2] sm:$0xff] %v519
        %671 = vst [vmem:[#allocation2 + $0x8] sm:$0xff] %v521
        %672 = vst [vmem:[#allocation2 + $0x10] sm:$0xff] %v612
        %673 = vst [vmem:[#allocation2 + $0x18] sm:$0xff] %v614
        %674 = vst [vmem:[#allocation2 + $0x20] sm:$0xff] %v523
        %675 = vst [vmem:[#allocation2 + $0x28] sm:$0xff] %v525
        %676 = vst [vmem:[#allocation2 + $0x30] sm:$0xff] %v616
        %677 = vst [vmem:[#allocation2 + $0x38] sm:$0xff] %v618
        %678 = vst [vmem:[#allocation2 + $0x40] sm:$0xff] %v529
        %679 = vst [vmem:[#allocation2 + $0x48] sm:$0xff] %v531
        %680 = vst [vmem:[#allocation2 + $0x50] sm:$0xff] %v622
        %681 = vst [vmem:[#allocation2 + $0x58] sm:$0xff] %v624
        %682 = vst [vmem:[#allocation2 + $0x60] sm:$0xff] %v533
        %683 = vst [vmem:[#allocation2 + $0x68] sm:$0xff] %v535
        %684 = vst [vmem:[#allocation2 + $0x70] sm:$0xff] %v626
        %685 = vst [vmem:[#allocation2 + $0x78] sm:$0xff] %v628
        %686 = vst [vmem:[#allocation2 + $0x80] sm:$0xff] %v539
        %687 = vst [vmem:[#allocation2 + $0x88] sm:$0xff] %v541
        %688 = vst [vmem:[#allocation2 + $0x90] sm:$0xff] %v632
        %689 = vst [vmem:[#allocation2 + $0x98] sm:$0xff] %v634
        %690 = vst [vmem:[#allocation2 + $0xa0] sm:$0xff] %v543
        %691 = vst [vmem:[#allocation2 + $0xa8] sm:$0xff] %v545
        %692 = vst [vmem:[#allocation2 + $0xb0] sm:$0xff] %v636
        %693 = vst [vmem:[#allocation2 + $0xb8] sm:$0xff] %v638
        %694 = vst [vmem:[#allocation2 + $0xc0] sm:$0xff] %v549
        %695 = vst [vmem:[#allocation2 + $0xc8] sm:$0xff] %v551
        %696 = vst [vmem:[#allocation2 + $0xd0] sm:$0xff] %v642
        %697 = vst [vmem:[#allocation2 + $0xd8] sm:$0xff] %v644
        %698 = vst [vmem:[#allocation2 + $0xe0] sm:$0xff] %v553
        %699 = vst [vmem:[#allocation2 + $0xe8] sm:$0xff] %v555
        %700 = vst [vmem:[#allocation2 + $0xf0] sm:$0xff] %v646
        %701 = vst [vmem:[#allocation2 + $0xf8] sm:$0xff] %v648
        %702 = vst [vmem:[#allocation2 + $0x100] sm:$0xff] %v559
        %703 = vst [vmem:[#allocation2 + $0x108] sm:$0xff] %v561
        %704 = vst [vmem:[#allocation2 + $0x110] sm:$0xff] %v652
        %705 = vst [vmem:[#allocation2 + $0x118] sm:$0xff] %v654
        %706 = vst [vmem:[#allocation2 + $0x120] sm:$0xff] %v563
        %707 = vst [vmem:[#allocation2 + $0x128] sm:$0xff] %v565
        %708 = vst [vmem:[#allocation2 + $0x130] sm:$0xff] %v656
        %709 = vst [vmem:[#allocation2 + $0x138] sm:$0xff] %v658
        %710 = vst [vmem:[#allocation2 + $0x140] sm:$0xff] %v569
        %711 = vst [vmem:[#allocation2 + $0x148] sm:$0xff] %v571
        %712 = vst [vmem:[#allocation2 + $0x150] sm:$0xff] %v662
        %713 = vst [vmem:[#allocation2 + $0x158] sm:$0xff] %v664
        %714 = vst [vmem:[#allocation2 + $0x160] sm:$0xff] %v573
        %715 = vst [vmem:[#allocation2 + $0x168] sm:$0xff] %v575
        %716 = vst [vmem:[#allocation2 + $0x170] sm:$0xff] %v666
        %717 = vst [vmem:[#allocation2 + $0x178] sm:$0xff] %v668
        %v718 = vld [vmem:[#allocation2] sm:$0xff]
        %v719 = vld [vmem:[#allocation2 + $0x8] sm:$0xff]
        %v720 = vld [vmem:[#allocation2 + $0x10] sm:$0xff]
        %v721 = vld [vmem:[#allocation2 + $0x18] sm:$0xff]
        %v722 = vld [vmem:[#allocation2 + $0x20] sm:$0xff]
        %v723 = vld [vmem:[#allocation2 + $0x28] sm:$0xff]
        %v724 = vld [vmem:[#allocation2 + $0x30] sm:$0xff]
        %v725 = vld [vmem:[#allocation2 + $0x38] sm:$0xff]
        %v758 = vunpack.c.l.b16 %v289
        %v759 = vunpack.c.h.b16 %v289
        %v760 = vunpack.c.l.b16 %v290
        %v761 = vunpack.c.h.b16 %v290
        %v762 = vunpack.c.l.b16 %v291
        %v763 = vunpack.c.h.b16 %v291
        %v764 = vunpack.c.l.b16 %v292
        %v765 = vunpack.c.h.b16 %v292
        %v766 = vunpack.c.l.b16 %v293
        %v767 = vunpack.c.h.b16 %v293
        %v768 = vunpack.c.l.b16 %v294
        %v769 = vunpack.c.h.b16 %v294
        %v770 = vunpack.c.l.b16 %v295
        %v771 = vunpack.c.h.b16 %v295
        %v772 = vunpack.c.l.b16 %v296
        %v773 = vunpack.c.h.b16 %v296
        %v774 = vunpack.c.l.b16 %v297
        %v775 = vunpack.c.h.b16 %v297
        %v776 = vunpack.c.l.b16 %v298
        %v777 = vunpack.c.h.b16 %v298
        %v778 = vunpack.c.l.b16 %v299
        %v779 = vunpack.c.h.b16 %v299
        %v780 = vunpack.c.l.b16 %v300
        %v781 = vunpack.c.h.b16 %v300
        %v782 = vunpack.c.l.b16 %v301
        %v783 = vunpack.c.h.b16 %v301
        %v784 = vunpack.c.l.b16 %v302
        %v785 = vunpack.c.h.b16 %v302
        %v786 = vunpack.c.l.b16 %v303
        %v787 = vunpack.c.h.b16 %v303
        %v788 = vunpack.c.l.b16 %v304
        %v789 = vunpack.c.h.b16 %v304
        %v790 = vunpack.c.l.b16 %v305
        %v791 = vunpack.c.h.b16 %v305
        %v792 = vunpack.c.l.b16 %v306
        %v793 = vunpack.c.h.b16 %v306
        %v794 = vunpack.c.l.b16 %v307
        %v795 = vunpack.c.h.b16 %v307
        %v796 = vunpack.c.l.b16 %v308
        %v797 = vunpack.c.h.b16 %v308
        %v798 = vunpack.c.l.b16 %v309
        %v799 = vunpack.c.h.b16 %v309
        %v800 = vunpack.c.l.b16 %v310
        %v801 = vunpack.c.h.b16 %v310
        %v802 = vunpack.c.l.b16 %v311
        %v803 = vunpack.c.h.b16 %v311
        %v804 = vunpack.c.l.b16 %v312
        %v805 = vunpack.c.h.b16 %v312
        %v806 = vunpack.c.l.b16 %v313
        %v807 = vunpack.c.h.b16 %v313
        %v808 = vunpack.c.l.b16 %v314
        %v809 = vunpack.c.h.b16 %v314
        %v810 = vunpack.c.l.b16 %v315
        %v811 = vunpack.c.h.b16 %v315
        %v812 = vunpack.c.l.b16 %v316
        %v813 = vunpack.c.h.b16 %v316
        %v814 = vunpack.c.l.b16 %v317
        %v815 = vunpack.c.h.b16 %v317
        %v816 = vunpack.c.l.b16 %v318
        %v817 = vunpack.c.h.b16 %v318
        %v818 = vunpack.c.l.b16 %v319
        %v819 = vunpack.c.h.b16 %v319
        %v820 = vunpack.c.l.b16 %v320
        %v821 = vunpack.c.h.b16 %v320
        %v822 = vpack.c.b16 %v762, %v758
        %v823 = vpack.c.b16 %v763, %v759
        %v824 = vpack.c.b16 %v764, %v760
        %v825 = vpack.c.b16 %v765, %v761
        %v826 = vpack.c.b16 %v770, %v766
        %v827 = vpack.c.b16 %v771, %v767
        %v828 = vpack.c.b16 %v772, %v768
        %v829 = vpack.c.b16 %v773, %v769
        %v830 = vpack.c.b16 %v778, %v774
        %v831 = vpack.c.b16 %v779, %v775
        %v832 = vpack.c.b16 %v780, %v776
        %v833 = vpack.c.b16 %v781, %v777
        %v834 = vpack.c.b16 %v786, %v782
        %v835 = vpack.c.b16 %v787, %v783
        %v836 = vpack.c.b16 %v788, %v784
        %v837 = vpack.c.b16 %v789, %v785
        %v838 = vpack.c.b16 %v794, %v790
        %v839 = vpack.c.b16 %v795, %v791
        %v840 = vpack.c.b16 %v796, %v792
        %v841 = vpack.c.b16 %v797, %v793
        %v842 = vpack.c.b16 %v802, %v798
        %v843 = vpack.c.b16 %v803, %v799
        %v844 = vpack.c.b16 %v804, %v800
        %v845 = vpack.c.b16 %v805, %v801
        %v846 = vpack.c.b16 %v810, %v806
        %v847 = vpack.c.b16 %v811, %v807
        %v848 = vpack.c.b16 %v812, %v808
        %v849 = vpack.c.b16 %v813, %v809
        %v850 = vpack.c.b16 %v818, %v814
        %v851 = vpack.c.b16 %v819, %v815
        %v852 = vpack.c.b16 %v820, %v816
        %v853 = vpack.c.b16 %v821, %v817
        %886 = vmatprep.subr.bf16.mxu0 %v851
        %887 = vmatpush1.bf16.msra.mxu0 %v850
        %888 = vmatprep.subr.bf16.mxu0 %v847
        %889 = vmatpush1.bf16.msra.mxu0 %v846
        %890 = vmatprep.subr.bf16.mxu0 %v843
        %891 = vmatpush1.bf16.msra.mxu0 %v842
        %892 = vmatprep.subr.bf16.mxu0 %v839
        %893 = vmatpush1.bf16.msra.mxu0 %v838
        %894 = vmatprep.subr.bf16.mxu0 %v835
        %895 = vmatpush1.bf16.msra.mxu0 %v834
        %896 = vmatprep.subr.bf16.mxu0 %v831
        %897 = vmatpush1.bf16.msra.mxu0 %v830
        %898 = vmatprep.subr.bf16.mxu0 %v827
        %899 = vmatpush1.bf16.msra.mxu0 %v826
        %900 = vmatprep.subr.bf16.mxu0 %v823
        %901 = vmatpush1.bf16.msra.mxu0 %v822
        %902 = vmatprep.subr.bf16.mxu0 0
        %903 = vmatpush2.bf16.msra.mxu0 0
        %904 = vmatprep.subr.bf16.mxu0 0
        %905 = vmatpush2.bf16.msra.mxu0 0
        %906 = vmatprep.subr.bf16.mxu0 0
        %907 = vmatpush2.bf16.msra.mxu0 0
        %908 = vmatprep.subr.bf16.mxu0 0
        %909 = vmatpush2.bf16.msra.mxu0 0
        %910 = vmatprep.subr.bf16.mxu0 0
        %911 = vmatpush2.bf16.msra.mxu0 0
        %912 = vmatprep.subr.bf16.mxu0 0
        %913 = vmatpush2.bf16.msra.mxu0 0
        %914 = vmatprep.subr.bf16.mxu0 0
        %915 = vmatpush2.bf16.msra.mxu0 0
        %916 = vmatprep.subr.bf16.mxu0 0
        %917 = vmatpush2.bf16.msra.mxu0 0
        %918 = vmatprep.mubr.bf16.mxu0 0
        %919 = vmatmul.mubr.bf16.gmra.mxu0 0
        %v920 = vpop.f32.mrf.mxu0
        %v921 = vadd.f32 0.0, %v920
        %v922 = vpop.f32.mrf.mxu0
        %v923 = vadd.f32 0.0, %v922
        %v924 = vpop.f32.mrf.mxu0
        %v925 = vadd.f32 0.0, %v924
        %v926 = vpop.f32.mrf.mxu0
        %v927 = vadd.f32 0.0, %v926
        %928 = vdwg.mxu0
        %929 = vmatprep.subr.bf16.mxu0 %v853
        %930 = vmatpush1.bf16.msra.mxu0 %v852
        %931 = vmatprep.subr.bf16.mxu0 %v849
        %932 = vmatpush1.bf16.msra.mxu0 %v848
        %933 = vmatprep.subr.bf16.mxu0 %v845
        %934 = vmatpush1.bf16.msra.mxu0 %v844
        %935 = vmatprep.subr.bf16.mxu0 %v841
        %936 = vmatpush1.bf16.msra.mxu0 %v840
        %937 = vmatprep.subr.bf16.mxu0 %v837
        %938 = vmatpush1.bf16.msra.mxu0 %v836
        %939 = vmatprep.subr.bf16.mxu0 %v833
        %940 = vmatpush1.bf16.msra.mxu0 %v832
        %941 = vmatprep.subr.bf16.mxu0 %v829
        %942 = vmatpush1.bf16.msra.mxu0 %v828
        %943 = vmatprep.subr.bf16.mxu0 %v825
        %944 = vmatpush1.bf16.msra.mxu0 %v824
        %945 = vmatprep.subr.bf16.mxu0 0
        %946 = vmatpush2.bf16.msra.mxu0 0
        %947 = vmatprep.subr.bf16.mxu0 0
        %948 = vmatpush2.bf16.msra.mxu0 0
        %949 = vmatprep.subr.bf16.mxu0 0
        %950 = vmatpush2.bf16.msra.mxu0 0
        %951 = vmatprep.subr.bf16.mxu0 0
        %952 = vmatpush2.bf16.msra.mxu0 0
        %953 = vmatprep.subr.bf16.mxu0 0
        %954 = vmatpush2.bf16.msra.mxu0 0
        %955 = vmatprep.subr.bf16.mxu0 0
        %956 = vmatpush2.bf16.msra.mxu0 0
        %957 = vmatprep.subr.bf16.mxu0 0
        %958 = vmatpush2.bf16.msra.mxu0 0
        %959 = vmatprep.subr.bf16.mxu0 0
        %960 = vmatpush2.bf16.msra.mxu0 0
        %961 = vmatprep.mubr.bf16.mxu0 0
        %962 = vmatmul.mubr.bf16.gmra.mxu0 0
        %v963 = vpop.f32.mrf.mxu0
        %v964 = vadd.f32 0.0, %v963
        %v965 = vpop.f32.mrf.mxu0
        %v966 = vadd.f32 0.0, %v965
        %v967 = vpop.f32.mrf.mxu0
        %v968 = vadd.f32 0.0, %v967
        %v969 = vpop.f32.mrf.mxu0
        %v970 = vadd.f32 0.0, %v969
        %971 = vdwg.mxu0
        %v972 = vadd.f32 %v718, %v921
        %v973 = vadd.f32 %v719, %v923
        %v974 = vadd.f32 %v720, %v964
        %v975 = vadd.f32 %v721, %v966
        %v976 = vadd.f32 %v722, %v925
        %v977 = vadd.f32 %v723, %v927
        %v978 = vadd.f32 %v724, %v968
        %v979 = vadd.f32 %v725, %v970
        %v980 = vmul.f32 %v972, 0.5
        %v981 = vmul.f32 %v976, 0.5
        %v982 = vtanh.pop %v980
        %v983 = vtanh.pop %v981
        %v984 = vmul.f32 %v982, 0.5
        %v985 = vmul.f32 %v983, 0.5
        %v986 = vadd.f32 %v984, 0.5
        %v987 = vadd.f32 %v985, 0.5
        %v988 = vmul.f32 %v973, 0.5
        %v989 = vmul.f32 %v977, 0.5
        %v990 = vtanh.pop %v988
        %v991 = vtanh.pop %v989
        %v992 = vmul.f32 %v990, 0.5
        %v993 = vmul.f32 %v991, 0.5
        %v994 = vadd.f32 %v992, 0.5
        %v995 = vadd.f32 %v993, 0.5
        %v996 = vtanh.pop %v974
        %v997 = vtanh.pop %v978
        %v998 = vmul.f32 %v975, 0.5
        %v999 = vmul.f32 %v979, 0.5
        %v1000 = vtanh.pop %v998
        %v1001 = vtanh.pop %v999
        %v1002 = vmul.f32 %v1000, 0.5
        %v1003 = vmul.f32 %v1001, 0.5
        %v1004 = vadd.f32 %v1002, 0.5
        %v1005 = vadd.f32 %v1003, 0.5
        %v1006 = vmul.f32 %v994, 0.0
        %v1007 = vmul.f32 %v995, 0.0
        %v1008 = vmul.f32 %v986, %v996
        %v1009 = vmul.f32 %v987, %v997
        %v1010 = vadd.f32 %v1006, %v1008
        %v1011 = vadd.f32 %v1007, %v1009
        %v1012 = vtanh.pop %v1010
        %v1013 = vtanh.pop %v1011
        %v1014 = vmul.f32 %v1004, %v1012
        %v1015 = vmul.f32 %v1005, %v1013
        %v1016 = vld [vmem:[#allocation2 + $0x40] sm:$0xff]
        %v1017 = vld [vmem:[#allocation2 + $0x48] sm:$0xff]
        %v1018 = vld [vmem:[#allocation2 + $0x50] sm:$0xff]
        %v1019 = vld [vmem:[#allocation2 + $0x58] sm:$0xff]
        %v1020 = vld [vmem:[#allocation2 + $0x60] sm:$0xff]
        %v1021 = vld [vmem:[#allocation2 + $0x68] sm:$0xff]
        %v1022 = vld [vmem:[#allocation2 + $0x70] sm:$0xff]
        %v1023 = vld [vmem:[#allocation2 + $0x78] sm:$0xff]
        %v1024 = vpack.c.bf16 %v1015, %v1014
        %1025 = vmatprep.subr.bf16.mxu0 %v851
        %1026 = vmatpush1.bf16.msra.mxu0 %v850
        %1027 = vmatprep.subr.bf16.mxu0 %v847
        %1028 = vmatpush1.bf16.msra.mxu0 %v846
        %1029 = vmatprep.subr.bf16.mxu0 %v843
        %1030 = vmatpush1.bf16.msra.mxu0 %v842
        %1031 = vmatprep.subr.bf16.mxu0 %v839
        %1032 = vmatpush1.bf16.msra.mxu0 %v838
        %1033 = vmatprep.subr.bf16.mxu0 %v835
        %1034 = vmatpush1.bf16.msra.mxu0 %v834
        %1035 = vmatprep.subr.bf16.mxu0 %v831
        %1036 = vmatpush1.bf16.msra.mxu0 %v830
        %1037 = vmatprep.subr.bf16.mxu0 %v827
        %1038 = vmatpush1.bf16.msra.mxu0 %v826
        %1039 = vmatprep.subr.bf16.mxu0 %v823
        %1040 = vmatpush1.bf16.msra.mxu0 %v822
        %1041 = vmatprep.subr.bf16.mxu0 0
        %1042 = vmatpush2.bf16.msra.mxu0 0
        %1043 = vmatprep.subr.bf16.mxu0 0
        %1044 = vmatpush2.bf16.msra.mxu0 0
        %1045 = vmatprep.subr.bf16.mxu0 0
        %1046 = vmatpush2.bf16.msra.mxu0 0
        %1047 = vmatprep.subr.bf16.mxu0 0
        %1048 = vmatpush2.bf16.msra.mxu0 0
        %1049 = vmatprep.subr.bf16.mxu0 0
        %1050 = vmatpush2.bf16.msra.mxu0 0
        %1051 = vmatprep.subr.bf16.mxu0 0
        %1052 = vmatpush2.bf16.msra.mxu0 0
        %1053 = vmatprep.subr.bf16.mxu0 0
        %1054 = vmatpush2.bf16.msra.mxu0 0
        %1055 = vmatprep.subr.bf16.mxu0 0
        %1056 = vmatpush2.bf16.msra.mxu0 0
        %1057 = vmatprep.mubr.bf16.mxu0 0
        %1058 = vmatmul.mubr.bf16.gmra.mxu0 %v1024
        %v1059 = vpop.f32.mrf.mxu0
        %v1060 = vadd.f32 0.0, %v1059
        %v1061 = vpop.f32.mrf.mxu0
        %v1062 = vadd.f32 0.0, %v1061
        %v1063 = vpop.f32.mrf.mxu0
        %v1064 = vadd.f32 0.0, %v1063
        %v1065 = vpop.f32.mrf.mxu0
        %v1066 = vadd.f32 0.0, %v1065
        %1067 = vdwg.mxu0
        %1068 = vmatprep.subr.bf16.mxu0 %v853
        %1069 = vmatpush1.bf16.msra.mxu0 %v852
        %1070 = vmatprep.subr.bf16.mxu0 %v849
        %1071 = vmatpush1.bf16.msra.mxu0 %v848
        %1072 = vmatprep.subr.bf16.mxu0 %v845
        %1073 = vmatpush1.bf16.msra.mxu0 %v844
        %1074 = vmatprep.subr.bf16.mxu0 %v841
        %1075 = vmatpush1.bf16.msra.mxu0 %v840
        %1076 = vmatprep.subr.bf16.mxu0 %v837
        %1077 = vmatpush1.bf16.msra.mxu0 %v836
        %1078 = vmatprep.subr.bf16.mxu0 %v833
        %1079 = vmatpush1.bf16.msra.mxu0 %v832
        %1080 = vmatprep.subr.bf16.mxu0 %v829
        %1081 = vmatpush1.bf16.msra.mxu0 %v828
        %1082 = vmatprep.subr.bf16.mxu0 %v825
        %1083 = vmatpush1.bf16.msra.mxu0 %v824
        %1084 = vmatprep.subr.bf16.mxu0 0
        %1085 = vmatpush2.bf16.msra.mxu0 0
        %1086 = vmatprep.subr.bf16.mxu0 0
        %1087 = vmatpush2.bf16.msra.mxu0 0
        %1088 = vmatprep.subr.bf16.mxu0 0
        %1089 = vmatpush2.bf16.msra.mxu0 0
        %1090 = vmatprep.subr.bf16.mxu0 0
        %1091 = vmatpush2.bf16.msra.mxu0 0
        %1092 = vmatprep.subr.bf16.mxu0 0
        %1093 = vmatpush2.bf16.msra.mxu0 0
        %1094 = vmatprep.subr.bf16.mxu0 0
        %1095 = vmatpush2.bf16.msra.mxu0 0
        %1096 = vmatprep.subr.bf16.mxu0 0
        %1097 = vmatpush2.bf16.msra.mxu0 0
        %1098 = vmatprep.subr.bf16.mxu0 0
        %1099 = vmatpush2.bf16.msra.mxu0 0
        %1100 = vmatprep.mubr.bf16.mxu0 0
        %1101 = vmatmul.mubr.bf16.gmra.mxu0 %v1024
        %v1102 = vpop.f32.mrf.mxu0
        %v1103 = vadd.f32 0.0, %v1102
        %v1104 = vpop.f32.mrf.mxu0
        %v1105 = vadd.f32 0.0, %v1104
        %v1106 = vpop.f32.mrf.mxu0
        %v1107 = vadd.f32 0.0, %v1106
        %v1108 = vpop.f32.mrf.mxu0
        %v1109 = vadd.f32 0.0, %v1108
        %1110 = vdwg.mxu0
        %v1111 = vadd.f32 %v1016, %v1060
        %v1112 = vadd.f32 %v1017, %v1062
        %v1113 = vadd.f32 %v1018, %v1103
        %v1114 = vadd.f32 %v1019, %v1105
        %v1115 = vadd.f32 %v1020, %v1064
        %v1116 = vadd.f32 %v1021, %v1066
        %v1117 = vadd.f32 %v1022, %v1107
        %v1118 = vadd.f32 %v1023, %v1109
        %v1119 = vmul.f32 %v1111, 0.5
        %v1120 = vmul.f32 %v1115, 0.5
        %v1121 = vtanh.pop %v1119
        %v1122 = vtanh.pop %v1120
        %v1123 = vmul.f32 %v1121, 0.5
        %v1124 = vmul.f32 %v1122, 0.5
        %v1125 = vadd.f32 %v1123, 0.5
        %v1126 = vadd.f32 %v1124, 0.5
        %v1127 = vmul.f32 %v1112, 0.5
        %v1128 = vmul.f32 %v1116, 0.5
        %v1129 = vtanh.pop %v1127
        %v1130 = vtanh.pop %v1128
        %v1131 = vmul.f32 %v1129, 0.5
        %v1132 = vmul.f32 %v1130, 0.5
        %v1133 = vadd.f32 %v1131, 0.5
        %v1134 = vadd.f32 %v1132, 0.5
        %v1135 = vtanh.pop %v1113
        %v1136 = vtanh.pop %v1117
        %v1137 = vmul.f32 %v1114, 0.5
        %v1138 = vmul.f32 %v1118, 0.5
        %v1139 = vtanh.pop %v1137
        %v1140 = vtanh.pop %v1138
        %v1141 = vmul.f32 %v1139, 0.5
        %v1142 = vmul.f32 %v1140, 0.5
        %v1143 = vadd.f32 %v1141, 0.5
        %v1144 = vadd.f32 %v1142, 0.5
        %v1145 = vmul.f32 %v1133, %v1010
        %v1146 = vmul.f32 %v1134, %v1011
        %v1147 = vmul.f32 %v1125, %v1135
        %v1148 = vmul.f32 %v1126, %v1136
        %v1149 = vadd.f32 %v1145, %v1147
        %v1150 = vadd.f32 %v1146, %v1148
        %v1151 = vtanh.pop %v1149
        %v1152 = vtanh.pop %v1150
        %v1153 = vmul.f32 %v1143, %v1151
        %v1154 = vmul.f32 %v1144, %v1152
        %v1155 = vld [vmem:[#allocation2 + $0x80] sm:$0xff]
        %v1156 = vld [vmem:[#allocation2 + $0x88] sm:$0xff]
        %v1157 = vld [vmem:[#allocation2 + $0x90] sm:$0xff]
        %v1158 = vld [vmem:[#allocation2 + $0x98] sm:$0xff]
        %v1159 = vld [vmem:[#allocation2 + $0xa0] sm:$0xff]
        %v1160 = vld [vmem:[#allocation2 + $0xa8] sm:$0xff]
        %v1161 = vld [vmem:[#allocation2 + $0xb0] sm:$0xff]
        %v1162 = vld [vmem:[#allocation2 + $0xb8] sm:$0xff]
        %v1163 = vpack.c.bf16 %v1154, %v1153
        %1164 = vmatprep.subr.bf16.mxu0 %v851
        %1165 = vmatpush1.bf16.msra.mxu0 %v850
        %1166 = vmatprep.subr.bf16.mxu0 %v847
        %1167 = vmatpush1.bf16.msra.mxu0 %v846
        %1168 = vmatprep.subr.bf16.mxu0 %v843
        %1169 = vmatpush1.bf16.msra.mxu0 %v842
        %1170 = vmatprep.subr.bf16.mxu0 %v839
        %1171 = vmatpush1.bf16.msra.mxu0 %v838
        %1172 = vmatprep.subr.bf16.mxu0 %v835
        %1173 = vmatpush1.bf16.msra.mxu0 %v834
        %1174 = vmatprep.subr.bf16.mxu0 %v831
        %1175 = vmatpush1.bf16.msra.mxu0 %v830
        %1176 = vmatprep.subr.bf16.mxu0 %v827
        %1177 = vmatpush1.bf16.msra.mxu0 %v826
        %1178 = vmatprep.subr.bf16.mxu0 %v823
        %1179 = vmatpush1.bf16.msra.mxu0 %v822
        %1180 = vmatprep.subr.bf16.mxu0 0
        %1181 = vmatpush2.bf16.msra.mxu0 0
        %1182 = vmatprep.subr.bf16.mxu0 0
        %1183 = vmatpush2.bf16.msra.mxu0 0
        %1184 = vmatprep.subr.bf16.mxu0 0
        %1185 = vmatpush2.bf16.msra.mxu0 0
        %1186 = vmatprep.subr.bf16.mxu0 0
        %1187 = vmatpush2.bf16.msra.mxu0 0
        %1188 = vmatprep.subr.bf16.mxu0 0
        %1189 = vmatpush2.bf16.msra.mxu0 0
        %1190 = vmatprep.subr.bf16.mxu0 0
        %1191 = vmatpush2.bf16.msra.mxu0 0
        %1192 = vmatprep.subr.bf16.mxu0 0
        %1193 = vmatpush2.bf16.msra.mxu0 0
        %1194 = vmatprep.subr.bf16.mxu0 0
        %1195 = vmatpush2.bf16.msra.mxu0 0
        %1196 = vmatprep.mubr.bf16.mxu0 0
        %1197 = vmatmul.mubr.bf16.gmra.mxu0 %v1163
        %v1198 = vpop.f32.mrf.mxu0
        %v1199 = vadd.f32 0.0, %v1198
        %v1200 = vpop.f32.mrf.mxu0
        %v1201 = vadd.f32 0.0, %v1200
        %v1202 = vpop.f32.mrf.mxu0
        %v1203 = vadd.f32 0.0, %v1202
        %v1204 = vpop.f32.mrf.mxu0
        %v1205 = vadd.f32 0.0, %v1204
        %1206 = vdwg.mxu0
        %1207 = vmatprep.subr.bf16.mxu0 %v853
        %1208 = vmatpush1.bf16.msra.mxu0 %v852
        %1209 = vmatprep.subr.bf16.mxu0 %v849
        %1210 = vmatpush1.bf16.msra.mxu0 %v848
        %1211 = vmatprep.subr.bf16.mxu0 %v845
        %1212 = vmatpush1.bf16.msra.mxu0 %v844
        %1213 = vmatprep.subr.bf16.mxu0 %v841
        %1214 = vmatpush1.bf16.msra.mxu0 %v840
        %1215 = vmatprep.subr.bf16.mxu0 %v837
        %1216 = vmatpush1.bf16.msra.mxu0 %v836
        %1217 = vmatprep.subr.bf16.mxu0 %v833
        %1218 = vmatpush1.bf16.msra.mxu0 %v832
        %1219 = vmatprep.subr.bf16.mxu0 %v829
        %1220 = vmatpush1.bf16.msra.mxu0 %v828
        %1221 = vmatprep.subr.bf16.mxu0 %v825
        %1222 = vmatpush1.bf16.msra.mxu0 %v824
        %1223 = vmatprep.subr.bf16.mxu0 0
        %1224 = vmatpush2.bf16.msra.mxu0 0
        %1225 = vmatprep.subr.bf16.mxu0 0
        %1226 = vmatpush2.bf16.msra.mxu0 0
        %1227 = vmatprep.subr.bf16.mxu0 0
        %1228 = vmatpush2.bf16.msra.mxu0 0
        %1229 = vmatprep.subr.bf16.mxu0 0
        %1230 = vmatpush2.bf16.msra.mxu0 0
        %1231 = vmatprep.subr.bf16.mxu0 0
        %1232 = vmatpush2.bf16.msra.mxu0 0
        %1233 = vmatprep.subr.bf16.mxu0 0
        %1234 = vmatpush2.bf16.msra.mxu0 0
        %1235 = vmatprep.subr.bf16.mxu0 0
        %1236 = vmatpush2.bf16.msra.mxu0 0
        %1237 = vmatprep.subr.bf16.mxu0 0
        %1238 = vmatpush2.bf16.msra.mxu0 0
        %1239 = vmatprep.mubr.bf16.mxu0 0
        %1240 = vmatmul.mubr.bf16.gmra.mxu0 %v1163
        %v1241 = vpop.f32.mrf.mxu0
        %v1242 = vadd.f32 0.0, %v1241
        %v1243 = vpop.f32.mrf.mxu0
        %v1244 = vadd.f32 0.0, %v1243
        %v1245 = vpop.f32.mrf.mxu0
        %v1246 = vadd.f32 0.0, %v1245
        %v1247 = vpop.f32.mrf.mxu0
        %v1248 = vadd.f32 0.0, %v1247
        %1249 = vdwg.mxu0
        %v1250 = vadd.f32 %v1155, %v1199
        %v1251 = vadd.f32 %v1156, %v1201
        %v1252 = vadd.f32 %v1157, %v1242
        %v1253 = vadd.f32 %v1158, %v1244
        %v1254 = vadd.f32 %v1159, %v1203
        %v1255 = vadd.f32 %v1160, %v1205
        %v1256 = vadd.f32 %v1161, %v1246
        %v1257 = vadd.f32 %v1162, %v1248
        %v1258 = vmul.f32 %v1250, 0.5
        %v1259 = vmul.f32 %v1254, 0.5
        %v1260 = vtanh.pop %v1258
        %v1261 = vtanh.pop %v1259
        %v1262 = vmul.f32 %v1260, 0.5
        %v1263 = vmul.f32 %v1261, 0.5
        %v1264 = vadd.f32 %v1262, 0.5
        %v1265 = vadd.f32 %v1263, 0.5
        %v1266 = vmul.f32 %v1251, 0.5
        %v1267 = vmul.f32 %v1255, 0.5
        %v1268 = vtanh.pop %v1266
        %v1269 = vtanh.pop %v1267
        %v1270 = vmul.f32 %v1268, 0.5
        %v1271 = vmul.f32 %v1269, 0.5
        %v1272 = vadd.f32 %v1270, 0.5
        %v1273 = vadd.f32 %v1271, 0.5
        %v1274 = vtanh.pop %v1252
        %v1275 = vtanh.pop %v1256
        %v1276 = vmul.f32 %v1253, 0.5
        %v1277 = vmul.f32 %v1257, 0.5
        %v1278 = vtanh.pop %v1276
        %v1279 = vtanh.pop %v1277
        %v1280 = vmul.f32 %v1278, 0.5
        %v1281 = vmul.f32 %v1279, 0.5
        %v1282 = vadd.f32 %v1280, 0.5
        %v1283 = vadd.f32 %v1281, 0.5
        %v1284 = vmul.f32 %v1272, %v1149
        %v1285 = vmul.f32 %v1273, %v1150
        %v1286 = vmul.f32 %v1264, %v1274
        %v1287 = vmul.f32 %v1265, %v1275
        %v1288 = vadd.f32 %v1284, %v1286
        %v1289 = vadd.f32 %v1285, %v1287
        %v1290 = vtanh.pop %v1288
        %v1291 = vtanh.pop %v1289
        %v1292 = vmul.f32 %v1282, %v1290
        %v1293 = vmul.f32 %v1283, %v1291
        %v1294 = vld [vmem:[#allocation2 + $0xc0] sm:$0xff]
        %v1295 = vld [vmem:[#allocation2 + $0xc8] sm:$0xff]
        %v1296 = vld [vmem:[#allocation2 + $0xd0] sm:$0xff]
        %v1297 = vld [vmem:[#allocation2 + $0xd8] sm:$0xff]
        %v1298 = vld [vmem:[#allocation2 + $0xe0] sm:$0xff]
        %v1299 = vld [vmem:[#allocation2 + $0xe8] sm:$0xff]
        %v1300 = vld [vmem:[#allocation2 + $0xf0] sm:$0xff]
        %v1301 = vld [vmem:[#allocation2 + $0xf8] sm:$0xff]
        %v1302 = vpack.c.bf16 %v1293, %v1292
        %1303 = vmatprep.subr.bf16.mxu0 %v851
        %1304 = vmatpush1.bf16.msra.mxu0 %v850
        %1305 = vmatprep.subr.bf16.mxu0 %v847
        %1306 = vmatpush1.bf16.msra.mxu0 %v846
        %1307 = vmatprep.subr.bf16.mxu0 %v843
        %1308 = vmatpush1.bf16.msra.mxu0 %v842
        %1309 = vmatprep.subr.bf16.mxu0 %v839
        %1310 = vmatpush1.bf16.msra.mxu0 %v838
        %1311 = vmatprep.subr.bf16.mxu0 %v835
        %1312 = vmatpush1.bf16.msra.mxu0 %v834
        %1313 = vmatprep.subr.bf16.mxu0 %v831
        %1314 = vmatpush1.bf16.msra.mxu0 %v830
        %1315 = vmatprep.subr.bf16.mxu0 %v827
        %1316 = vmatpush1.bf16.msra.mxu0 %v826
        %1317 = vmatprep.subr.bf16.mxu0 %v823
        %1318 = vmatpush1.bf16.msra.mxu0 %v822
        %1319 = vmatprep.subr.bf16.mxu0 0
        %1320 = vmatpush2.bf16.msra.mxu0 0
        %1321 = vmatprep.subr.bf16.mxu0 0
        %1322 = vmatpush2.bf16.msra.mxu0 0
        %1323 = vmatprep.subr.bf16.mxu0 0
        %1324 = vmatpush2.bf16.msra.mxu0 0
        %1325 = vmatprep.subr.bf16.mxu0 0
        %1326 = vmatpush2.bf16.msra.mxu0 0
        %1327 = vmatprep.subr.bf16.mxu0 0
        %1328 = vmatpush2.bf16.msra.mxu0 0
        %1329 = vmatprep.subr.bf16.mxu0 0
        %1330 = vmatpush2.bf16.msra.mxu0 0
        %1331 = vmatprep.subr.bf16.mxu0 0
        %1332 = vmatpush2.bf16.msra.mxu0 0
        %1333 = vmatprep.subr.bf16.mxu0 0
        %1334 = vmatpush2.bf16.msra.mxu0 0
        %1335 = vmatprep.mubr.bf16.mxu0 0
        %1336 = vmatmul.mubr.bf16.gmra.mxu0 %v1302
        %v1337 = vpop.f32.mrf.mxu0
        %v1338 = vadd.f32 0.0, %v1337
        %v1339 = vpop.f32.mrf.mxu0
        %v1340 = vadd.f32 0.0, %v1339
        %v1341 = vpop.f32.mrf.mxu0
        %v1342 = vadd.f32 0.0, %v1341
        %v1343 = vpop.f32.mrf.mxu0
        %v1344 = vadd.f32 0.0, %v1343
        %1345 = vdwg.mxu0
        %1346 = vmatprep.subr.bf16.mxu0 %v853
        %1347 = vmatpush1.bf16.msra.mxu0 %v852
        %1348 = vmatprep.subr.bf16.mxu0 %v849
        %1349 = vmatpush1.bf16.msra.mxu0 %v848
        %1350 = vmatprep.subr.bf16.mxu0 %v845
        %1351 = vmatpush1.bf16.msra.mxu0 %v844
        %1352 = vmatprep.subr.bf16.mxu0 %v841
        %1353 = vmatpush1.bf16.msra.mxu0 %v840
        %1354 = vmatprep.subr.bf16.mxu0 %v837
        %1355 = vmatpush1.bf16.msra.mxu0 %v836
        %1356 = vmatprep.subr.bf16.mxu0 %v833
        %1357 = vmatpush1.bf16.msra.mxu0 %v832
        %1358 = vmatprep.subr.bf16.mxu0 %v829
        %1359 = vmatpush1.bf16.msra.mxu0 %v828
        %1360 = vmatprep.subr.bf16.mxu0 %v825
        %1361 = vmatpush1.bf16.msra.mxu0 %v824
        %1362 = vmatprep.subr.bf16.mxu0 0
        %1363 = vmatpush2.bf16.msra.mxu0 0
        %1364 = vmatprep.subr.bf16.mxu0 0
        %1365 = vmatpush2.bf16.msra.mxu0 0
        %1366 = vmatprep.subr.bf16.mxu0 0
        %1367 = vmatpush2.bf16.msra.mxu0 0
        %1368 = vmatprep.subr.bf16.mxu0 0
        %1369 = vmatpush2.bf16.msra.mxu0 0
        %1370 = vmatprep.subr.bf16.mxu0 0
        %1371 = vmatpush2.bf16.msra.mxu0 0
        %1372 = vmatprep.subr.bf16.mxu0 0
        %1373 = vmatpush2.bf16.msra.mxu0 0
        %1374 = vmatprep.subr.bf16.mxu0 0
        %1375 = vmatpush2.bf16.msra.mxu0 0
        %1376 = vmatprep.subr.bf16.mxu0 0
        %1377 = vmatpush2.bf16.msra.mxu0 0
        %1378 = vmatprep.mubr.bf16.mxu0 0
        %1379 = vmatmul.mubr.bf16.gmra.mxu0 %v1302
        %v1380 = vpop.f32.mrf.mxu0
        %v1381 = vadd.f32 0.0, %v1380
        %v1382 = vpop.f32.mrf.mxu0
        %v1383 = vadd.f32 0.0, %v1382
        %v1384 = vpop.f32.mrf.mxu0
        %v1385 = vadd.f32 0.0, %v1384
        %v1386 = vpop.f32.mrf.mxu0
        %v1387 = vadd.f32 0.0, %v1386
        %1388 = vdwg.mxu0
        %v1389 = vadd.f32 %v1294, %v1338
        %v1390 = vadd.f32 %v1295, %v1340
        %v1391 = vadd.f32 %v1296, %v1381
        %v1392 = vadd.f32 %v1297, %v1383
        %v1393 = vadd.f32 %v1298, %v1342
        %v1394 = vadd.f32 %v1299, %v1344
        %v1395 = vadd.f32 %v1300, %v1385
        %v1396 = vadd.f32 %v1301, %v1387
        %v1397 = vmul.f32 %v1389, 0.5
        %v1398 = vmul.f32 %v1393, 0.5
        %v1399 = vtanh.pop %v1397
        %v1400 = vtanh.pop %v1398
        %v1401 = vmul.f32 %v1399, 0.5
        %v1402 = vmul.f32 %v1400, 0.5
        %v1403 = vadd.f32 %v1401, 0.5
        %v1404 = vadd.f32 %v1402, 0.5
        %v1405 = vmul.f32 %v1390, 0.5
        %v1406 = vmul.f32 %v1394, 0.5
        %v1407 = vtanh.pop %v1405
        %v1408 = vtanh.pop %v1406
        %v1409 = vmul.f32 %v1407, 0.5
        %v1410 = vmul.f32 %v1408, 0.5
        %v1411 = vadd.f32 %v1409, 0.5
        %v1412 = vadd.f32 %v1410, 0.5
        %v1413 = vtanh.pop %v1391
        %v1414 = vtanh.pop %v1395
        %v1415 = vmul.f32 %v1392, 0.5
        %v1416 = vmul.f32 %v1396, 0.5
        %v1417 = vtanh.pop %v1415
        %v1418 = vtanh.pop %v1416
        %v1419 = vmul.f32 %v1417, 0.5
        %v1420 = vmul.f32 %v1418, 0.5
        %v1421 = vadd.f32 %v1419, 0.5
        %v1422 = vadd.f32 %v1420, 0.5
        %v1423 = vmul.f32 %v1411, %v1288
        %v1424 = vmul.f32 %v1412, %v1289
        %v1425 = vmul.f32 %v1403, %v1413
        %v1426 = vmul.f32 %v1404, %v1414
        %v1427 = vadd.f32 %v1423, %v1425
        %v1428 = vadd.f32 %v1424, %v1426
        %v1429 = vtanh.pop %v1427
        %v1430 = vtanh.pop %v1428
        %v1431 = vmul.f32 %v1421, %v1429
        %v1432 = vmul.f32 %v1422, %v1430
        %v1433 = vld [vmem:[#allocation2 + $0x100] sm:$0xff]
        %v1434 = vld [vmem:[#allocation2 + $0x108] sm:$0xff]
        %v1435 = vld [vmem:[#allocation2 + $0x110] sm:$0xff]
        %v1436 = vld [vmem:[#allocation2 + $0x118] sm:$0xff]
        %v1437 = vld [vmem:[#allocation2 + $0x120] sm:$0xff]
        %v1438 = vld [vmem:[#allocation2 + $0x128] sm:$0xff]
        %v1439 = vld [vmem:[#allocation2 + $0x130] sm:$0xff]
        %v1440 = vld [vmem:[#allocation2 + $0x138] sm:$0xff]
        %v1441 = vpack.c.bf16 %v1432, %v1431
        %1442 = vmatprep.subr.bf16.mxu0 %v851
        %1443 = vmatpush1.bf16.msra.mxu0 %v850
        %1444 = vmatprep.subr.bf16.mxu0 %v847
        %1445 = vmatpush1.bf16.msra.mxu0 %v846
        %1446 = vmatprep.subr.bf16.mxu0 %v843
        %1447 = vmatpush1.bf16.msra.mxu0 %v842
        %1448 = vmatprep.subr.bf16.mxu0 %v839
        %1449 = vmatpush1.bf16.msra.mxu0 %v838
        %1450 = vmatprep.subr.bf16.mxu0 %v835
        %1451 = vmatpush1.bf16.msra.mxu0 %v834
        %1452 = vmatprep.subr.bf16.mxu0 %v831
        %1453 = vmatpush1.bf16.msra.mxu0 %v830
        %1454 = vmatprep.subr.bf16.mxu0 %v827
        %1455 = vmatpush1.bf16.msra.mxu0 %v826
        %1456 = vmatprep.subr.bf16.mxu0 %v823
        %1457 = vmatpush1.bf16.msra.mxu0 %v822
        %1458 = vmatprep.subr.bf16.mxu0 0
        %1459 = vmatpush2.bf16.msra.mxu0 0
        %1460 = vmatprep.subr.bf16.mxu0 0
        %1461 = vmatpush2.bf16.msra.mxu0 0
        %1462 = vmatprep.subr.bf16.mxu0 0
        %1463 = vmatpush2.bf16.msra.mxu0 0
        %1464 = vmatprep.subr.bf16.mxu0 0
        %1465 = vmatpush2.bf16.msra.mxu0 0
        %1466 = vmatprep.subr.bf16.mxu0 0
        %1467 = vmatpush2.bf16.msra.mxu0 0
        %1468 = vmatprep.subr.bf16.mxu0 0
        %1469 = vmatpush2.bf16.msra.mxu0 0
        %1470 = vmatprep.subr.bf16.mxu0 0
        %1471 = vmatpush2.bf16.msra.mxu0 0
        %1472 = vmatprep.subr.bf16.mxu0 0
        %1473 = vmatpush2.bf16.msra.mxu0 0
        %1474 = vmatprep.mubr.bf16.mxu0 0
        %1475 = vmatmul.mubr.bf16.gmra.mxu0 %v1441
        %v1476 = vpop.f32.mrf.mxu0
        %v1477 = vadd.f32 0.0, %v1476
        %v1478 = vpop.f32.mrf.mxu0
        %v1479 = vadd.f32 0.0, %v1478
        %v1480 = vpop.f32.mrf.mxu0
        %v1481 = vadd.f32 0.0, %v1480
        %v1482 = vpop.f32.mrf.mxu0
        %v1483 = vadd.f32 0.0, %v1482
        %1484 = vdwg.mxu0
        %1485 = vmatprep.subr.bf16.mxu0 %v853
        %1486 = vmatpush1.bf16.msra.mxu0 %v852
        %1487 = vmatprep.subr.bf16.mxu0 %v849
        %1488 = vmatpush1.bf16.msra.mxu0 %v848
        %1489 = vmatprep.subr.bf16.mxu0 %v845
        %1490 = vmatpush1.bf16.msra.mxu0 %v844
        %1491 = vmatprep.subr.bf16.mxu0 %v841
        %1492 = vmatpush1.bf16.msra.mxu0 %v840
        %1493 = vmatprep.subr.bf16.mxu0 %v837
        %1494 = vmatpush1.bf16.msra.mxu0 %v836
        %1495 = vmatprep.subr.bf16.mxu0 %v833
        %1496 = vmatpush1.bf16.msra.mxu0 %v832
        %1497 = vmatprep.subr.bf16.mxu0 %v829
        %1498 = vmatpush1.bf16.msra.mxu0 %v828
        %1499 = vmatprep.subr.bf16.mxu0 %v825
        %1500 = vmatpush1.bf16.msra.mxu0 %v824
        %1501 = vmatprep.subr.bf16.mxu0 0
        %1502 = vmatpush2.bf16.msra.mxu0 0
        %1503 = vmatprep.subr.bf16.mxu0 0
        %1504 = vmatpush2.bf16.msra.mxu0 0
        %1505 = vmatprep.subr.bf16.mxu0 0
        %1506 = vmatpush2.bf16.msra.mxu0 0
        %1507 = vmatprep.subr.bf16.mxu0 0
        %1508 = vmatpush2.bf16.msra.mxu0 0
        %1509 = vmatprep.subr.bf16.mxu0 0
        %1510 = vmatpush2.bf16.msra.mxu0 0
        %1511 = vmatprep.subr.bf16.mxu0 0
        %1512 = vmatpush2.bf16.msra.mxu0 0
        %1513 = vmatprep.subr.bf16.mxu0 0
        %1514 = vmatpush2.bf16.msra.mxu0 0
        %1515 = vmatprep.subr.bf16.mxu0 0
        %1516 = vmatpush2.bf16.msra.mxu0 0
        %1517 = vmatprep.mubr.bf16.mxu0 0
        %1518 = vmatmul.mubr.bf16.gmra.mxu0 %v1441
        %v1519 = vpop.f32.mrf.mxu0
        %v1520 = vadd.f32 0.0, %v1519
        %v1521 = vpop.f32.mrf.mxu0
        %v1522 = vadd.f32 0.0, %v1521
        %v1523 = vpop.f32.mrf.mxu0
        %v1524 = vadd.f32 0.0, %v1523
        %v1525 = vpop.f32.mrf.mxu0
        %v1526 = vadd.f32 0.0, %v1525
        %1527 = vdwg.mxu0
        %v1528 = vadd.f32 %v1433, %v1477
        %v1529 = vadd.f32 %v1434, %v1479
        %v1530 = vadd.f32 %v1435, %v1520
        %v1531 = vadd.f32 %v1436, %v1522
        %v1532 = vadd.f32 %v1437, %v1481
        %v1533 = vadd.f32 %v1438, %v1483
        %v1534 = vadd.f32 %v1439, %v1524
        %v1535 = vadd.f32 %v1440, %v1526
        %v1536 = vmul.f32 %v1528, 0.5
        %v1537 = vmul.f32 %v1532, 0.5
        %v1538 = vtanh.pop %v1536
        %v1539 = vtanh.pop %v1537
        %v1540 = vmul.f32 %v1538, 0.5
        %v1541 = vmul.f32 %v1539, 0.5
        %v1542 = vadd.f32 %v1540, 0.5
        %v1543 = vadd.f32 %v1541, 0.5
        %v1544 = vmul.f32 %v1529, 0.5
        %v1545 = vmul.f32 %v1533, 0.5
        %v1546 = vtanh.pop %v1544
        %v1547 = vtanh.pop %v1545
        %v1548 = vmul.f32 %v1546, 0.5
        %v1549 = vmul.f32 %v1547, 0.5
        %v1550 = vadd.f32 %v1548, 0.5
        %v1551 = vadd.f32 %v1549, 0.5
        %v1552 = vtanh.pop %v1530
        %v1553 = vtanh.pop %v1534
        %v1554 = vmul.f32 %v1531, 0.5
        %v1555 = vmul.f32 %v1535, 0.5
        %v1556 = vtanh.pop %v1554
        %v1557 = vtanh.pop %v1555
        %v1558 = vmul.f32 %v1556, 0.5
        %v1559 = vmul.f32 %v1557, 0.5
        %v1560 = vadd.f32 %v1558, 0.5
        %v1561 = vadd.f32 %v1559, 0.5
        %v1562 = vmul.f32 %v1550, %v1427
        %v1563 = vmul.f32 %v1551, %v1428
        %v1564 = vmul.f32 %v1542, %v1552
        %v1565 = vmul.f32 %v1543, %v1553
        %v1566 = vadd.f32 %v1562, %v1564
        %v1567 = vadd.f32 %v1563, %v1565
        %v1568 = vtanh.pop %v1566
        %v1569 = vtanh.pop %v1567
        %v1570 = vmul.f32 %v1560, %v1568
        %v1571 = vmul.f32 %v1561, %v1569
        %v1572 = vld [vmem:[#allocation2 + $0x140] sm:$0xff]
        %v1573 = vld [vmem:[#allocation2 + $0x148] sm:$0xff]
        %v1574 = vld [vmem:[#allocation2 + $0x150] sm:$0xff]
        %v1575 = vld [vmem:[#allocation2 + $0x158] sm:$0xff]
        %v1576 = vld [vmem:[#allocation2 + $0x160] sm:$0xff]
        %v1577 = vld [vmem:[#allocation2 + $0x168] sm:$0xff]
        %v1578 = vld [vmem:[#allocation2 + $0x170] sm:$0xff]
        %v1579 = vld [vmem:[#allocation2 + $0x178] sm:$0xff]
        %v1580 = vpack.c.bf16 %v1571, %v1570
        %1581 = vmatprep.subr.bf16.mxu0 %v851
        %1582 = vmatpush1.bf16.msra.mxu0 %v850
        %1583 = vmatprep.subr.bf16.mxu0 %v847
        %1584 = vmatpush1.bf16.msra.mxu0 %v846
        %1585 = vmatprep.subr.bf16.mxu0 %v843
        %1586 = vmatpush1.bf16.msra.mxu0 %v842
        %1587 = vmatprep.subr.bf16.mxu0 %v839
        %1588 = vmatpush1.bf16.msra.mxu0 %v838
        %1589 = vmatprep.subr.bf16.mxu0 %v835
        %1590 = vmatpush1.bf16.msra.mxu0 %v834
        %1591 = vmatprep.subr.bf16.mxu0 %v831
        %1592 = vmatpush1.bf16.msra.mxu0 %v830
        %1593 = vmatprep.subr.bf16.mxu0 %v827
        %1594 = vmatpush1.bf16.msra.mxu0 %v826
        %1595 = vmatprep.subr.bf16.mxu0 %v823
        %1596 = vmatpush1.bf16.msra.mxu0 %v822
        %1597 = vmatprep.subr.bf16.mxu0 0
        %1598 = vmatpush2.bf16.msra.mxu0 0
        %1599 = vmatprep.subr.bf16.mxu0 0
        %1600 = vmatpush2.bf16.msra.mxu0 0
        %1601 = vmatprep.subr.bf16.mxu0 0
        %1602 = vmatpush2.bf16.msra.mxu0 0
        %1603 = vmatprep.subr.bf16.mxu0 0
        %1604 = vmatpush2.bf16.msra.mxu0 0
        %1605 = vmatprep.subr.bf16.mxu0 0
        %1606 = vmatpush2.bf16.msra.mxu0 0
        %1607 = vmatprep.subr.bf16.mxu0 0
        %1608 = vmatpush2.bf16.msra.mxu0 0
        %1609 = vmatprep.subr.bf16.mxu0 0
        %1610 = vmatpush2.bf16.msra.mxu0 0
        %1611 = vmatprep.subr.bf16.mxu0 0
        %1612 = vmatpush2.bf16.msra.mxu0 0
        %1613 = vmatprep.mubr.bf16.mxu0 0
        %1614 = vmatmul.mubr.bf16.gmra.mxu0 %v1580
        %v1615 = vpop.f32.mrf.mxu0
        %v1616 = vadd.f32 0.0, %v1615
        %v1617 = vpop.f32.mrf.mxu0
        %v1618 = vadd.f32 0.0, %v1617
        %v1619 = vpop.f32.mrf.mxu0
        %v1620 = vadd.f32 0.0, %v1619
        %v1621 = vpop.f32.mrf.mxu0
        %v1622 = vadd.f32 0.0, %v1621
        %1623 = vdwg.mxu0
        %1624 = vmatprep.subr.bf16.mxu0 %v853
        %1625 = vmatpush1.bf16.msra.mxu0 %v852
        %1626 = vmatprep.subr.bf16.mxu0 %v849
        %1627 = vmatpush1.bf16.msra.mxu0 %v848
        %1628 = vmatprep.subr.bf16.mxu0 %v845
        %1629 = vmatpush1.bf16.msra.mxu0 %v844
        %1630 = vmatprep.subr.bf16.mxu0 %v841
        %1631 = vmatpush1.bf16.msra.mxu0 %v840
        %1632 = vmatprep.subr.bf16.mxu0 %v837
        %1633 = vmatpush1.bf16.msra.mxu0 %v836
        %1634 = vmatprep.subr.bf16.mxu0 %v833
        %1635 = vmatpush1.bf16.msra.mxu0 %v832
        %1636 = vmatprep.subr.bf16.mxu0 %v829
        %1637 = vmatpush1.bf16.msra.mxu0 %v828
        %1638 = vmatprep.subr.bf16.mxu0 %v825
        %1639 = vmatpush1.bf16.msra.mxu0 %v824
        %1640 = vmatprep.subr.bf16.mxu0 0
        %1641 = vmatpush2.bf16.msra.mxu0 0
        %1642 = vmatprep.subr.bf16.mxu0 0
        %1643 = vmatpush2.bf16.msra.mxu0 0
        %1644 = vmatprep.subr.bf16.mxu0 0
        %1645 = vmatpush2.bf16.msra.mxu0 0
        %1646 = vmatprep.subr.bf16.mxu0 0
        %1647 = vmatpush2.bf16.msra.mxu0 0
        %1648 = vmatprep.subr.bf16.mxu0 0
        %1649 = vmatpush2.bf16.msra.mxu0 0
        %1650 = vmatprep.subr.bf16.mxu0 0
        %1651 = vmatpush2.bf16.msra.mxu0 0
        %1652 = vmatprep.subr.bf16.mxu0 0
        %1653 = vmatpush2.bf16.msra.mxu0 0
        %1654 = vmatprep.subr.bf16.mxu0 0
        %1655 = vmatpush2.bf16.msra.mxu0 0
        %1656 = vmatprep.mubr.bf16.mxu0 0
        %1657 = vmatmul.mubr.bf16.gmra.mxu0 %v1580
        %v1658 = vpop.f32.mrf.mxu0
        %v1659 = vadd.f32 0.0, %v1658
        %v1660 = vpop.f32.mrf.mxu0
        %v1661 = vadd.f32 0.0, %v1660
        %v1662 = vpop.f32.mrf.mxu0
        %v1663 = vadd.f32 0.0, %v1662
        %v1664 = vpop.f32.mrf.mxu0
        %v1665 = vadd.f32 0.0, %v1664
        %1666 = vdwg.mxu0
        %v1667 = vadd.f32 %v1572, %v1616
        %v1668 = vadd.f32 %v1573, %v1618
        %v1669 = vadd.f32 %v1574, %v1659
        %v1670 = vadd.f32 %v1575, %v1661
        %v1671 = vadd.f32 %v1576, %v1620
        %v1672 = vadd.f32 %v1577, %v1622
        %v1673 = vadd.f32 %v1578, %v1663
        %v1674 = vadd.f32 %v1579, %v1665
        %v1675 = vmul.f32 %v1667, 0.5
        %v1676 = vmul.f32 %v1671, 0.5
        %v1677 = vtanh.pop %v1675
        %v1678 = vtanh.pop %v1676
        %v1679 = vmul.f32 %v1677, 0.5
        %v1680 = vmul.f32 %v1678, 0.5
        %v1681 = vadd.f32 %v1679, 0.5
        %v1682 = vadd.f32 %v1680, 0.5
        %v1683 = vmul.f32 %v1668, 0.5
        %v1684 = vmul.f32 %v1672, 0.5
        %v1685 = vtanh.pop %v1683
        %v1686 = vtanh.pop %v1684
        %v1687 = vmul.f32 %v1685, 0.5
        %v1688 = vmul.f32 %v1686, 0.5
        %v1689 = vadd.f32 %v1687, 0.5
        %v1690 = vadd.f32 %v1688, 0.5
        %v1691 = vtanh.pop %v1669
        %v1692 = vtanh.pop %v1673
        %v1693 = vmul.f32 %v1670, 0.5
        %v1694 = vmul.f32 %v1674, 0.5
        %v1695 = vtanh.pop %v1693
        %v1696 = vtanh.pop %v1694
        %v1697 = vmul.f32 %v1695, 0.5
        %v1698 = vmul.f32 %v1696, 0.5
        %v1699 = vadd.f32 %v1697, 0.5
        %v1700 = vadd.f32 %v1698, 0.5
        %v1701 = vmul.f32 %v1689, %v1566
        %v1702 = vmul.f32 %v1690, %v1567
        %v1703 = vmul.f32 %v1681, %v1691
        %v1704 = vmul.f32 %v1682, %v1692
        %v1705 = vadd.f32 %v1701, %v1703
        %v1706 = vadd.f32 %v1702, %v1704
        %v1707 = vtanh.pop %v1705
        %v1708 = vtanh.pop %v1706
        %v1709 = vmul.f32 %v1699, %v1707
        %v1710 = vmul.f32 %v1700, %v1708
        %1711 = vst [vmem:[%s269] sm:$0xff] %v1709
        %1712 = vst [vmem:[%s269 + $0x8] sm:$0xff] %v1710
        %s1713 = sand.u32 %s119, 1
        %s1714 = scalar_lea.sflag [#allocation5], %s1713
        %s1715 = sand.u32 %s119, 1
        %s1716 = smul.addr %s1715, 16
        %s1717 = scalar_lea.vmem [#allocation9], %s1716
        // Predicated region
        $region49: #{tpu_custom_call.1} parent=35 // pred_check
          %p1718 = pneg %p129
        $region50: #{tpu_custom_call.1} parent=35 // pred_check_branch
          %1720 = sbr.rel (%p1718) target = $region52
        $region51: #{tpu_custom_call.1} parent=35 // pred_region
          %s1721 = smul.u32 2, %s22
          %s1723 = ssub.s32 256, 256
          %1724 = vsyncadd %s1714, %s1723
          %s1725 = smul.addr %s1721, 128
          %s1726 = scalar_lea.hbm %s4, %s1725
          %s1727 = sshll.u32 %s1717, 4
          %s1728 = int_to_ptr.vmem [resolvable:$true] %s1727
          %1733 = dma.vmem_to_hbm [thread:$0]  %s1728, 256, %s1726, %s1714, 128, 128, 8
        $region52: #{tpu_custom_call.1} parent=35 // pred_fallthru
          _
      $region36: #{tpu_custom_call.1} parent=5 // pred_fallthru
        _
      %p1734 = scmp.le.s32.totalorder 2, %s17
      // Predicated region
      $region53: #{tpu_custom_call.1} parent=5 // pred_check
        %p1735 = pneg %p1734
      $region54: #{tpu_custom_call.1} parent=5 // pred_check_branch
        %1737 = sbr.rel (%p1735) target = $region56
      $region55: #{tpu_custom_call.1} parent=5 // pred_region
        %s1738 = ssub.s32 %s17, 2
        // Predicated region
        $region57: #{tpu_custom_call.1} parent=55 // pred_check
          %p1739 = pneg %p135
        $region58: #{tpu_custom_call.1} parent=55 // pred_check_branch
          %1741 = sbr.rel (%p1739) target = $region60
        $region59: #{tpu_custom_call.1} parent=55 // pred_region
          %s1742 = sand.u32 %s120, 1
          %s1743 = scalar_lea.sflag [#allocation5], %s1742
          %s1744 = sand.u32 %s120, 1
          %s1745 = smul.addr %s1744, 16
          %s1746 = scalar_lea.vmem [#allocation9], %s1745
          %1747 = dma.done %s1743, 256
        $region60: #{tpu_custom_call.1} parent=55 // pred_fallthru
          _
      $region56: #{tpu_custom_call.1} parent=5 // pred_fallthru
        _
    $region6: #{tpu_custom_call.1} parent=1 // loop_footer
      %s21 = sadd.s32 1, %s17
    $region7: #{tpu_custom_call.1} parent=1 // loop_footer_branch
      %16 = sbr.rel target = $region3
    $region8: #{tpu_custom_call.1} parent=1 // loop_exit
      _
    %1748 = vsyncpa [#allocation4], 1
    %s1749 = scalar_lea.sflag [#allocation4], 1
    %1750 = vsyncpa %s1749, 1
    %1751 = vsyncpa [#allocation7], 1
    %1752 = vsyncpa [#allocation5], 1
    %s1753 = scalar_lea.sflag [#allocation5], 1
    %1754 = vsyncpa %s1753, 1

</llo_original>
